<compile_context>
chip_gen: v7x
topology: tpu7x:2x2x1
jax: 0.10.0
libtpu: 0.0.40
codegen_flags: <defaults>
</compile_context>

<pallas_src>
import functools

import jax
import jax.numpy as jnp
from jax import lax
from jax.experimental import pallas as pl
from jax.experimental.pallas import tpu as pltpu

EPS = 1e-5
MXU_DTYPE = jnp.float32   # set to jnp.bfloat16 for production (looser numerics)


def resblock_kernel(x_ref, mask_ref, w1_ref, g1_ref, b1_ref,
                    w2_ref, g2_ref, b2_ref, out_ref, h_ref,
                    *, wp, base, m, inv_count):
    # x_ref:    (C, m + 2*base)  transposed, spatially zero-padded, flattened
    #                            input with `base` extra halo lanes per side.
    # mask_ref: (1, m)           1.0 at real pixels, 0.0 at the padding halo.
    # w*_ref:   (C, 9*C)         im2col weights (tap-major);  g*/b*: (C, 1).
    # out_ref:  (C, m)           result in the padded-flat frame (halo junk is
    #                            discarded by the wrapper).
    # h_ref:    (C, m + 2*base)  VMEM staging buffer for the conv2 input.
    C = out_ref.shape[0]
    interior = mask_ref[...] != 0.0          # (1, m) bool, broadcasts over C

    def patches_and_center(src_ref):
        # 9 shifted (C, m) windows = plain lane-offset slice loads, stacked
        # tap-major along sublanes -> (9*C, m) so the conv is ONE matmul with
        # contraction depth 9*C.
        taps = []
        for dy in (-1, 0, 1):
            for dx in (-1, 0, 1):
                off = base + dy * wp + dx
                taps.append(src_ref[:, off:off + m])
        return jnp.concatenate(taps, axis=0), taps[4]   # taps[4]: dy=dx=0

    def bn_scale_shift(y, gamma, beta):
        # Training-mode BatchNorm stats over the interior pixels only, single
        # reduction pass; return per-channel scale/shift so the apply is one
        # FMA.  rsqrt runs on the EUP slot.
        ym = jnp.where(interior, y, 0.0)
        mean = jnp.sum(ym, axis=1, keepdims=True) * inv_count
        var = jnp.sum(ym * ym, axis=1, keepdims=True) * inv_count - mean * mean
        scale = gamma * lax.rsqrt(var + EPS)
        return scale, beta - mean * scale

    # ---- conv1 (fused im2col matmul) -> BN1 -> ReLU -------------------------
    p1, residual = patches_and_center(x_ref)          # residual == original x
    y1 = jnp.dot(w1_ref[...].astype(MXU_DTYPE), p1.astype(MXU_DTYPE),
                 preferred_element_type=jnp.float32)
    s1, t1 = bn_scale_shift(y1, g1_ref[...], b1_ref[...])
    # jnp.where re-zeros the halo lanes == exactly the zero padding conv2 needs.
    h = jnp.where(interior, jnp.maximum(y1 * s1 + t1, 0.0), 0.0)

    # Stage h for conv2: zero only the two halo bands, one aligned dense store
    # for the interior (no full-activation padded scratch, no strided fills).
    h_ref[:, :base] = jnp.zeros((C, base), jnp.float32)
    h_ref[:, base + m:] = jnp.zeros((C, h_ref.shape[1] - base - m), jnp.float32)
    h_ref[:, base:base + m] = h

    # ---- conv2 -> BN2 -> +residual -> ReLU ----------------------------------
    p2, _ = patches_and_center(h_ref)
    y2 = jnp.dot(w2_ref[...].astype(MXU_DTYPE), p2.astype(MXU_DTYPE),
                 preferred_element_type=jnp.float32)
    s2, t2 = bn_scale_shift(y2, g2_ref[...], b2_ref[...])
    out_ref[...] = jnp.maximum(y2 * s2 + t2 + residual, 0.0)


def resblock_pallas(x_nchw, w1_oihw, g1, b1, w2_oihw, g2, b2):
    N, C, H, W = x_nchw.shape
    Hp, Wp = H + 2, W + 2
    M = N * Hp * Wp                         # padded-image pixels (lane axis)
    P = N * H * W                           # real pixels = BN population
    B = ((Wp + 1 + 127) // 128) * 128       # halo band, 128-aligned

    # NCHW -> (C, N, Hp, Wp) -> (C, M), then lane-pad by B on both sides.
    xt = jnp.transpose(x_nchw, (1, 0, 2, 3)).astype(jnp.float32)
    x_flat = jnp.pad(xt, ((0, 0), (0, 0), (1, 1), (1, 1))).reshape(C, M)
    x_ext = jnp.pad(x_flat, ((0, 0), (B, B)))

    # Interior mask: 1.0 at real pixels, 0.0 at the zero-padding halo.
    mask = jnp.pad(jnp.ones((N, H, W), jnp.float32),
                   ((0, 0), (1, 1), (1, 1))).reshape(1, M)

    def taps(w_oihw):   # OIHW -> (O, kh, kw, I) -> (O, 9*I), tap-major
        return jnp.transpose(w_oihw, (0, 2, 3, 1)).reshape(C, 9 * C).astype(jnp.float32)

    col = lambda v: v.reshape(C, 1).astype(jnp.float32)

    kernel = functools.partial(resblock_kernel, wp=Wp, base=B, m=M,
                               inv_count=1.0 / P)
    vmem = pltpu.MemorySpace.VMEM
    # TODO(synk): for large N*H*W (v7x's 64 MiB VMEM), tile the pixel axis with
    # a grid and a two-pass BatchNorm (cross-tile stats accumulation), marking
    # the pixel axis "parallel" to use both v7x TensorCores; single-shot BN
    # stats are only valid here because the whole batch is resident at once.
    out_flat = pl.pallas_call(
        kernel,
        out_shape=jax.ShapeDtypeStruct((C, M), jnp.float32),
        in_specs=[pl.BlockSpec(memory_space=vmem)] * 8,
        out_specs=pl.BlockSpec(memory_space=vmem),
        scratch_shapes=[pltpu.VMEM((C, M + 2 * B), jnp.float32)],
        compiler_params=pltpu.CompilerParams(vmem_limit_bytes=32 * 1024 * 1024),
    )(x_ext, mask, taps(w1_oihw), col(g1), col(b1),
      taps(w2_oihw), col(g2), col(b2))

    # (C, M) -> (C, N, Hp, Wp) -> interior -> NCHW (cheap XLA reshuffle).
    out = out_flat.reshape(C, N, Hp, Wp)[:, :, 1:H + 1, 1:W + 1]
    return jnp.transpose(out, (1, 0, 2, 3))


def resblock_ref(x, w1, g1, b1, w2, g2, b2):
    # Pure-JAX reference matching the PyTorch forward (training-mode BN).
    def conv(x, w):
        return lax.conv_general_dilated(
            x, w, window_strides=(1, 1), padding=((1, 1), (1, 1)),
            dimension_numbers=('NCHW', 'OIHW', 'NCHW'))

    def bn(y, g, b):
        mean = jnp.mean(y, axis=(0, 2, 3), keepdims=True)
        var = jnp.mean((y - mean) ** 2, axis=(0, 2, 3), keepdims=True)
        return ((y - mean) * lax.rsqrt(var + EPS)
                * g.reshape(1, -1, 1, 1) + b.reshape(1, -1, 1, 1))

    y = jax.nn.relu(bn(conv(x, w1), g1, b1))
    y = bn(conv(y, w2), g2, b2)
    return jax.nn.relu(y + x)


if __name__ == "__main__":
    N, C, H, W = 2, 8, 16, 16          # filters = 8
    key = jax.random.PRNGKey(0)
    kx, k1, k2, k3, k4, k5, k6 = jax.random.split(key, 7)

    x = jax.random.normal(kx, (N, C, H, W), jnp.float32)
    w1 = jax.random.normal(k1, (C, C, 3, 3), jnp.float32) * 0.1   # conv1 (OIHW)
    w2 = jax.random.normal(k2, (C, C, 3, 3), jnp.float32) * 0.1   # conv2 (OIHW)
    g1 = 1.0 + 0.1 * jax.random.normal(k3, (C,), jnp.float32)     # BN1 affine
    b1 = 0.1 * jax.random.normal(k4, (C,), jnp.float32)
    g2 = 1.0 + 0.1 * jax.random.normal(k5, (C,), jnp.float32)     # BN2 affine
    b2 = 0.1 * jax.random.normal(k6, (C,), jnp.float32)

    out = jax.block_until_ready(resblock_pallas(x, w1, g1, b1, w2, g2, b2))
    ref = resblock_ref(x, w1, g1, b1, w2, g2, b2)
    assert out.shape == (N, C, H, W)
    assert jnp.allclose(out, ref, atol=1e-4, rtol=1e-4), "mismatch vs reference"
    print("KERNEL_OK")
</pallas_src>

<mosaic_0001>
module attributes {stable_mosaic.version = 11 : i64} {
  func.func @resblock_kernel(%arg0: memref<8x904xf32, #tpu.memory_space<vmem>>, %arg1: memref<1x648xf32, #tpu.memory_space<vmem>>, %arg2: memref<8x72xf32, #tpu.memory_space<vmem>>, %arg3: memref<8x1xf32, #tpu.memory_space<vmem>>, %arg4: memref<8x1xf32, #tpu.memory_space<vmem>>, %arg5: memref<8x72xf32, #tpu.memory_space<vmem>>, %arg6: memref<8x1xf32, #tpu.memory_space<vmem>>, %arg7: memref<8x1xf32, #tpu.memory_space<vmem>>, %arg8: memref<8x648xf32, #tpu.memory_space<vmem>>, %arg9: memref<8x904xf32, #tpu.memory_space<vmem>>) attributes {dimension_semantics = [], scalar_prefetch = 0 : i64, scratch_operands = 1 : i64, tpu.core_type = #tpu.core_type<tc>} {
    %c0 = arith.constant 0 : index
    %c0_0 = arith.constant 0 : index
    %0 = vector.load %arg1[%c0, %c0_0] : memref<1x648xf32, #tpu.memory_space<vmem>>, vector<1x648xf32>
    %cst = arith.constant 0.000000e+00 : f32
    %1 = vector.broadcast %cst : f32 to vector<1x648xf32>
    %2 = arith.cmpf one, %0, %1 : vector<1x648xf32>
    %c0_1 = arith.constant 0 : index
    %c109 = arith.constant 109 : index
    %3 = vector.load %arg0[%c0_1, %c109] : memref<8x904xf32, #tpu.memory_space<vmem>>, vector<8x648xf32>
    %c0_2 = arith.constant 0 : index
    %c110 = arith.constant 110 : index
    %4 = vector.load %arg0[%c0_2, %c110] : memref<8x904xf32, #tpu.memory_space<vmem>>, vector<8x648xf32>
    %c0_3 = arith.constant 0 : index
    %c111 = arith.constant 111 : index
    %5 = vector.load %arg0[%c0_3, %c111] : memref<8x904xf32, #tpu.memory_space<vmem>>, vector<8x648xf32>
    %c0_4 = arith.constant 0 : index
    %c127 = arith.constant 127 : index
    %6 = vector.load %arg0[%c0_4, %c127] : memref<8x904xf32, #tpu.memory_space<vmem>>, vector<8x648xf32>
    %c0_5 = arith.constant 0 : index
    %c128 = arith.constant 128 : index
    %7 = vector.load %arg0[%c0_5, %c128] : memref<8x904xf32, #tpu.memory_space<vmem>>, vector<8x648xf32>
    %c0_6 = arith.constant 0 : index
    %c129 = arith.constant 129 : index
    %8 = vector.load %arg0[%c0_6, %c129] : memref<8x904xf32, #tpu.memory_space<vmem>>, vector<8x648xf32>
    %c0_7 = arith.constant 0 : index
    %c145 = arith.constant 145 : index
    %9 = vector.load %arg0[%c0_7, %c145] : memref<8x904xf32, #tpu.memory_space<vmem>>, vector<8x648xf32>
    %c0_8 = arith.constant 0 : index
    %c146 = arith.constant 146 : index
    %10 = vector.load %arg0[%c0_8, %c146] : memref<8x904xf32, #tpu.memory_space<vmem>>, vector<8x648xf32>
    %c0_9 = arith.constant 0 : index
    %c147 = arith.constant 147 : index
    %11 = vector.load %arg0[%c0_9, %c147] : memref<8x904xf32, #tpu.memory_space<vmem>>, vector<8x648xf32>
    %12 = tpu.concatenate %3, %4, %5, %6, %7, %8, %9, %10, %11 in 0 : vector<8x648xf32>, vector<8x648xf32>, vector<8x648xf32>, vector<8x648xf32>, vector<8x648xf32>, vector<8x648xf32>, vector<8x648xf32>, vector<8x648xf32>, vector<8x648xf32> -> vector<72x648xf32>
    %c0_10 = arith.constant 0 : index
    %c0_11 = arith.constant 0 : index
    %13 = vector.load %arg2[%c0_10, %c0_11] : memref<8x72xf32, #tpu.memory_space<vmem>>, vector<8x72xf32>
    %cst_12 = arith.constant dense<0.000000e+00> : vector<8x648xf32>
    %14 = tpu.matmul %13, %12, %cst_12 {dimension_numbers = #tpu.dot_dimension_numbers<[1], [0], [0], [1], [0, 0, 1, 1], [], []>} : vector<8x72xf32>, vector<72x648xf32>, vector<8x648xf32> -> vector<8x648xf32>
    %c0_13 = arith.constant 0 : index
    %c0_14 = arith.constant 0 : index
    %15 = vector.load %arg3[%c0_13, %c0_14] : memref<8x1xf32, #tpu.memory_space<vmem>>, vector<8x1xf32>
    %c0_15 = arith.constant 0 : index
    %c0_16 = arith.constant 0 : index
    %16 = vector.load %arg4[%c0_15, %c0_16] : memref<8x1xf32, #tpu.memory_space<vmem>>, vector<8x1xf32>
    %cst_17 = arith.constant 0.000000e+00 : f32
    %17 = vector.shape_cast %2 : vector<1x648xi1> to vector<1x648xi1>
    %18 = vector.broadcast %17 : vector<1x648xi1> to vector<8x648xi1>
    %19 = vector.broadcast %cst_17 : f32 to vector<8x648xf32>
    %20 = arith.select %18, %14, %19 : vector<8x648xi1>, vector<8x648xf32>
    %cst_18 = arith.constant dense<0.000000e+00> : vector<8xf32>
    %21 = vector.multi_reduction <add>, %20, %cst_18 [1] : vector<8x648xf32> to vector<8xf32>
    %22 = vector.shape_cast %21 : vector<8xf32> to vector<8x1xf32>
    %cst_19 = arith.constant 0.001953125 : f32
    %23 = vector.broadcast %cst_19 : f32 to vector<8x1xf32>
    %24 = arith.mulf %22, %23 : vector<8x1xf32>
    %25 = arith.mulf %20, %20 : vector<8x648xf32>
    %cst_20 = arith.constant dense<0.000000e+00> : vector<8xf32>
    %26 = vector.multi_reduction <add>, %25, %cst_20 [1] : vector<8x648xf32> to vector<8xf32>
    %27 = vector.shape_cast %26 : vector<8xf32> to vector<8x1xf32>
    %cst_21 = arith.constant 0.001953125 : f32
    %28 = vector.broadcast %cst_21 : f32 to vector<8x1xf32>
    %29 = arith.mulf %27, %28 : vector<8x1xf32>
    %30 = arith.mulf %24, %24 : vector<8x1xf32>
    %31 = arith.subf %29, %30 : vector<8x1xf32>
    %cst_22 = arith.constant 9.99999974E-6 : f32
    %32 = vector.broadcast %cst_22 : f32 to vector<8x1xf32>
    %33 = arith.addf %31, %32 : vector<8x1xf32>
    %34 = math.rsqrt %33 : vector<8x1xf32>
    %35 = arith.mulf %15, %34 : vector<8x1xf32>
    %36 = arith.mulf %24, %35 : vector<8x1xf32>
    %37 = arith.subf %16, %36 : vector<8x1xf32>
    %38 = vector.broadcast %35 : vector<8x1xf32> to vector<8x648xf32>
    %39 = arith.mulf %14, %38 : vector<8x648xf32>
    %40 = vector.broadcast %37 : vector<8x1xf32> to vector<8x648xf32>
    %41 = arith.addf %39, %40 : vector<8x648xf32>
    %cst_23 = arith.constant 0.000000e+00 : f32
    %42 = vector.broadcast %cst_23 : f32 to vector<8x648xf32>
    %43 = arith.maximumf %41, %42 : vector<8x648xf32>
    %cst_24 = arith.constant 0.000000e+00 : f32
    %44 = vector.shape_cast %2 : vector<1x648xi1> to vector<1x648xi1>
    %45 = vector.broadcast %44 : vector<1x648xi1> to vector<8x648xi1>
    %46 = vector.broadcast %cst_24 : f32 to vector<8x648xf32>
    %47 = arith.select %45, %43, %46 : vector<8x648xi1>, vector<8x648xf32>
    %cst_25 = arith.constant 0.000000e+00 : f32
    %48 = vector.broadcast %cst_25 : f32 to vector<8x128xf32>
    %c0_26 = arith.constant 0 : index
    %c0_27 = arith.constant 0 : index
    %49 = vector.load %arg9[%c0_26, %c0_27] : memref<8x904xf32, #tpu.memory_space<vmem>>, vector<8x128xf32>
    tpu.vector_store %arg9[%c0_26, %c0_27], %48 {strides = array<i32>} : memref<8x904xf32, #tpu.memory_space<vmem>>, vector<8x128xf32>,
    %cst_28 = arith.constant 0.000000e+00 : f32
    %50 = vector.broadcast %cst_28 : f32 to vector<8x128xf32>
    %c0_29 = arith.constant 0 : index
    %c776 = arith.constant 776 : index
    %51 = vector.load %arg9[%c0_29, %c776] : memref<8x904xf32, #tpu.memory_space<vmem>>, vector<8x128xf32>
    tpu.vector_store %arg9[%c0_29, %c776], %50 {strides = array<i32>} : memref<8x904xf32, #tpu.memory_space<vmem>>, vector<8x128xf32>,
    %c0_30 = arith.constant 0 : index
    %c128_31 = arith.constant 128 : index
    %52 = vector.load %arg9[%c0_30, %c128_31] : memref<8x904xf32, #tpu.memory_space<vmem>>, vector<8x648xf32>
    tpu.vector_store %arg9[%c0_30, %c128_31], %47 {strides = array<i32>} : memref<8x904xf32, #tpu.memory_space<vmem>>, vector<8x648xf32>,
    %c0_32 = arith.constant 0 : index
    %c109_33 = arith.constant 109 : index
    %53 = vector.load %arg9[%c0_32, %c109_33] : memref<8x904xf32, #tpu.memory_space<vmem>>, vector<8x648xf32>
    %c0_34 = arith.constant 0 : index
    %c110_35 = arith.constant 110 : index
    %54 = vector.load %arg9[%c0_34, %c110_35] : memref<8x904xf32, #tpu.memory_space<vmem>>, vector<8x648xf32>
    %c0_36 = arith.constant 0 : index
    %c111_37 = arith.constant 111 : index
    %55 = vector.load %arg9[%c0_36, %c111_37] : memref<8x904xf32, #tpu.memory_space<vmem>>, vector<8x648xf32>
    %c0_38 = arith.constant 0 : index
    %c127_39 = arith.constant 127 : index
    %56 = vector.load %arg9[%c0_38, %c127_39] : memref<8x904xf32, #tpu.memory_space<vmem>>, vector<8x648xf32>
    %c0_40 = arith.constant 0 : index
    %c128_41 = arith.constant 128 : index
    %57 = vector.load %arg9[%c0_40, %c128_41] : memref<8x904xf32, #tpu.memory_space<vmem>>, vector<8x648xf32>
    %c0_42 = arith.constant 0 : index
    %c129_43 = arith.constant 129 : index
    %58 = vector.load %arg9[%c0_42, %c129_43] : memref<8x904xf32, #tpu.memory_space<vmem>>, vector<8x648xf32>
    %c0_44 = arith.constant 0 : index
    %c145_45 = arith.constant 145 : index
    %59 = vector.load %arg9[%c0_44, %c145_45] : memref<8x904xf32, #tpu.memory_space<vmem>>, vector<8x648xf32>
    %c0_46 = arith.constant 0 : index
    %c146_47 = arith.constant 146 : index
    %60 = vector.load %arg9[%c0_46, %c146_47] : memref<8x904xf32, #tpu.memory_space<vmem>>, vector<8x648xf32>
    %c0_48 = arith.constant 0 : index
    %c147_49 = arith.constant 147 : index
    %61 = vector.load %arg9[%c0_48, %c147_49] : memref<8x904xf32, #tpu.memory_space<vmem>>, vector<8x648xf32>
    %62 = tpu.concatenate %53, %54, %55, %56, %57, %58, %59, %60, %61 in 0 : vector<8x648xf32>, vector<8x648xf32>, vector<8x648xf32>, vector<8x648xf32>, vector<8x648xf32>, vector<8x648xf32>, vector<8x648xf32>, vector<8x648xf32>, vector<8x648xf32> -> vector<72x648xf32>
    %c0_50 = arith.constant 0 : index
    %c0_51 = arith.constant 0 : index
    %63 = vector.load %arg5[%c0_50, %c0_51] : memref<8x72xf32, #tpu.memory_space<vmem>>, vector<8x72xf32>
    %cst_52 = arith.constant dense<0.000000e+00> : vector<8x648xf32>
    %64 = tpu.matmul %63, %62, %cst_52 {dimension_numbers = #tpu.dot_dimension_numbers<[1], [0], [0], [1], [0, 0, 1, 1], [], []>} : vector<8x72xf32>, vector<72x648xf32>, vector<8x648xf32> -> vector<8x648xf32>
    %c0_53 = arith.constant 0 : index
    %c0_54 = arith.constant 0 : index
    %65 = vector.load %arg6[%c0_53, %c0_54] : memref<8x1xf32, #tpu.memory_space<vmem>>, vector<8x1xf32>
    %c0_55 = arith.constant 0 : index
    %c0_56 = arith.constant 0 : index
    %66 = vector.load %arg7[%c0_55, %c0_56] : memref<8x1xf32, #tpu.memory_space<vmem>>, vector<8x1xf32>
    %cst_57 = arith.constant 0.000000e+00 : f32
    %67 = vector.shape_cast %2 : vector<1x648xi1> to vector<1x648xi1>
    %68 = vector.broadcast %67 : vector<1x648xi1> to vector<8x648xi1>
    %69 = vector.broadcast %cst_57 : f32 to vector<8x648xf32>
    %70 = arith.select %68, %64, %69 : vector<8x648xi1>, vector<8x648xf32>
    %cst_58 = arith.constant dense<0.000000e+00> : vector<8xf32>
    %71 = vector.multi_reduction <add>, %70, %cst_58 [1] : vector<8x648xf32> to vector<8xf32>
    %72 = vector.shape_cast %71 : vector<8xf32> to vector<8x1xf32>
    %cst_59 = arith.constant 0.001953125 : f32
    %73 = vector.broadcast %cst_59 : f32 to vector<8x1xf32>
    %74 = arith.mulf %72, %73 : vector<8x1xf32>
    %75 = arith.mulf %70, %70 : vector<8x648xf32>
    %cst_60 = arith.constant dense<0.000000e+00> : vector<8xf32>
    %76 = vector.multi_reduction <add>, %75, %cst_60 [1] : vector<8x648xf32> to vector<8xf32>
    %77 = vector.shape_cast %76 : vector<8xf32> to vector<8x1xf32>
    %cst_61 = arith.constant 0.001953125 : f32
    %78 = vector.broadcast %cst_61 : f32 to vector<8x1xf32>
    %79 = arith.mulf %77, %78 : vector<8x1xf32>
    %80 = arith.mulf %74, %74 : vector<8x1xf32>
    %81 = arith.subf %79, %80 : vector<8x1xf32>
    %cst_62 = arith.constant 9.99999974E-6 : f32
    %82 = vector.broadcast %cst_62 : f32 to vector<8x1xf32>
    %83 = arith.addf %81, %82 : vector<8x1xf32>
    %84 = math.rsqrt %83 : vector<8x1xf32>
    %85 = arith.mulf %65, %84 : vector<8x1xf32>
    %86 = arith.mulf %74, %85 : vector<8x1xf32>
    %87 = arith.subf %66, %86 : vector<8x1xf32>
    %88 = vector.broadcast %85 : vector<8x1xf32> to vector<8x648xf32>
    %89 = arith.mulf %64, %88 : vector<8x648xf32>
    %90 = vector.broadcast %87 : vector<8x1xf32> to vector<8x648xf32>
    %91 = arith.addf %89, %90 : vector<8x648xf32>
    %92 = arith.addf %91, %7 : vector<8x648xf32>
    %cst_63 = arith.constant 0.000000e+00 : f32
    %93 = vector.broadcast %cst_63 : f32 to vector<8x648xf32>
    %94 = arith.maximumf %92, %93 : vector<8x648xf32>
    %c0_64 = arith.constant 0 : index
    %c0_65 = arith.constant 0 : index
    %95 = vector.load %arg8[%c0_64, %c0_65] : memref<8x648xf32, #tpu.memory_space<vmem>>, vector<8x648xf32>
    tpu.vector_store %arg8[%c0_64, %c0_65], %94 {strides = array<i32>} : memref<8x648xf32, #tpu.memory_space<vmem>>, vector<8x648xf32>,
    return
  }
}

</mosaic_0001>

<llo_original>
// kernel: tpu_custom_call.1
$region0: #{tpu_custom_call.1}
  #allocation0 [shape = 'u32[]', space=smem, size = 0x4, offset = 0x4, fixed_abs, tag = 'smem constant byte address 0x4 - core index']
  #allocation1 [shape = 'u32[144,128]{1,0:T(1,128)}', space=vmem, size = 0x12000, scoped, tag = 'internal scratch']
  #allocation2 [shape = 'f32[8,904]{1,0:T(8,128)}', space=vmem, size = 0x8000, scoped, tag = 'scratch operand']
  %s0 = inlined_call_operand.hbm [shape: f32[8,904], index: 0, kind: input, shape index: {}]
  %s1 = inlined_call_operand.vmem [shape: f32[1,648], index: 1, kind: input, shape index: {}]
  %s2 = inlined_call_operand.vmem [shape: f32[8,72], index: 2, kind: input, shape index: {}]
  %s3 = inlined_call_operand.vmem [shape: f32[8,1], index: 3, kind: input, shape index: {}]
  %s4 = inlined_call_operand.vmem [shape: f32[8,1], index: 4, kind: input, shape index: {}]
  %s5 = inlined_call_operand.vmem [shape: f32[8,72], index: 5, kind: input, shape index: {}]
  %s6 = inlined_call_operand.vmem [shape: f32[8,1], index: 6, kind: input, shape index: {}]
  %s7 = inlined_call_operand.vmem [shape: f32[8,1], index: 7, kind: input, shape index: {}]
  %s8 = inlined_call_operand.hbm [shape: f32[8,648], index: 8, kind: output, shape index: {}]
  %s9 = sld [smem:[#allocation0]]
  $region46: #{tpu_custom_call.1} parent=0
    _
  %s11 = ssub.s32 1, %s9
  %s12 = scalar_select 0, %s11, %s9
  $region1: #{tpu_custom_call.1} parent=0
    #allocation3 [shape = 'u8[32768]{0}', space=vmem, size = 0x8000, scoped, tag = 'input window, operand 0, single buffered']
    #allocation4 [shape = 's32[1]{0}', space=sflag, size = 0x4, scoped, tag = 'scoped memory for tpu_custom_call.1']
    #allocation5 [shape = 's32[1]{0}', space=sflag, size = 0x4, scoped, tag = 'scoped memory for tpu_custom_call.1']
    #allocation6 [shape = 'u8[24576]{0}', space=vmem, size = 0x6000, scoped, tag = 'output window, operand 0, single buffered']
    %13 = vsyncpa [#allocation4], 0
    %14 = vsyncpa [#allocation5], 0
    // Predicated region
    $region2: #{tpu_custom_call.1} parent=1 // pred_check
      _
    $region3: #{tpu_custom_call.1} parent=1 // pred_check_branch
      %16 = sbr.rel (0) target = $region5
    $region4: #{tpu_custom_call.1} parent=1 // pred_region
      %s18 = ssub.s32 1024, 1024
      %19 = vsyncadd [#allocation4], %s18
      %s21 = sshll.u32 [#allocation3], 4
      %s22 = int_to_ptr.vmem [resolvable:$true] %s21
      %24 = dma.hbm_to_vmem [thread:$0]  %s0, 1024, %s22, [#allocation4]
    $region5: #{tpu_custom_call.1} parent=1 // pred_fallthru
      _
    // Predicated region
    $region6: #{tpu_custom_call.1} parent=1 // pred_check
      _
    $region7: #{tpu_custom_call.1} parent=1 // pred_check_branch
      %26 = sbr.rel (0) target = $region9
    $region8: #{tpu_custom_call.1} parent=1 // pred_region
      _
    $region9: #{tpu_custom_call.1} parent=1 // pred_fallthru
      _
    // Predicated region
    $region10: #{tpu_custom_call.1} parent=1 // pred_check
      _
    $region11: #{tpu_custom_call.1} parent=1 // pred_check_branch
      %28 = sbr.rel (0) target = $region13
    $region12: #{tpu_custom_call.1} parent=1 // pred_region
      _
    $region13: #{tpu_custom_call.1} parent=1 // pred_fallthru
      _
    // Predicated region
    $region14: #{tpu_custom_call.1} parent=1 // pred_check
      _
    $region15: #{tpu_custom_call.1} parent=1 // pred_check_branch
      %30 = sbr.rel (0) target = $region17
    $region16: #{tpu_custom_call.1} parent=1 // pred_region
      _
    $region17: #{tpu_custom_call.1} parent=1 // pred_fallthru
      _
    // Predicated region
    $region18: #{tpu_custom_call.1} parent=1 // pred_check
      _
    $region19: #{tpu_custom_call.1} parent=1 // pred_check_branch
      %32 = sbr.rel (0) target = $region21
    $region20: #{tpu_custom_call.1} parent=1 // pred_region
      _
    $region21: #{tpu_custom_call.1} parent=1 // pred_fallthru
      _
    // Predicated region
    $region22: #{tpu_custom_call.1} parent=1 // pred_check
      _
    $region23: #{tpu_custom_call.1} parent=1 // pred_check_branch
      %34 = sbr.rel (0) target = $region25
    $region24: #{tpu_custom_call.1} parent=1 // pred_region
      _
    $region25: #{tpu_custom_call.1} parent=1 // pred_fallthru
      _
    // Predicated region
    $region26: #{tpu_custom_call.1} parent=1 // pred_check
      _
    $region27: #{tpu_custom_call.1} parent=1 // pred_check_branch
      %36 = sbr.rel (0) target = $region29
    $region28: #{tpu_custom_call.1} parent=1 // pred_region
      _
    $region29: #{tpu_custom_call.1} parent=1 // pred_fallthru
      _
    // Predicated region
    $region30: #{tpu_custom_call.1} parent=1 // pred_check
      _
    $region31: #{tpu_custom_call.1} parent=1 // pred_check_branch
      %38 = sbr.rel (0) target = $region33
    $region32: #{tpu_custom_call.1} parent=1 // pred_region
      _
    $region33: #{tpu_custom_call.1} parent=1 // pred_fallthru
      _
    // Predicated region
    $region34: #{tpu_custom_call.1} parent=1 // pred_check
      _
    $region35: #{tpu_custom_call.1} parent=1 // pred_check_branch
      %40 = sbr.rel (0) target = $region37
    $region36: #{tpu_custom_call.1} parent=1 // pred_region
      %41 = dma.done [#allocation4], 1024
    $region37: #{tpu_custom_call.1} parent=1 // pred_fallthru
      _
    %v42 = vld [vmem:[%s1] sm:$0x3f]
    %vm43 = vcmp.ne.f32.partialorder %v42, 0.0
    %v44 = vld [vmem:[#allocation3] sm:$0xff]
    %v45 = vld [vmem:[#allocation3 + $0x8] sm:$0xff]
    %v46 = vld [vmem:[#allocation3 + $0x10] sm:$0xff]
    %v47 = vld [vmem:[#allocation3 + $0x18] sm:$0xff]
    %v48 = vld [vmem:[#allocation3 + $0x20] sm:$0xff]
    %v49 = vld [vmem:[#allocation3 + $0x28] sm:$0xff]
    %v50 = vld [vmem:[#allocation3 + $0x30] sm:$0xff]
    %57 = vrot.lane.b32.xlu0 %v44, 127
    %v58 = vpop.permute.xlu0 %57
    %59 = vrot.lane.b32.xlu0 %v45, 127
    %v60 = vpop.permute.xlu0 %59
    %61 = vrot.lane.b32.xlu0 %v46, 127
    %v62 = vpop.permute.xlu0 %61
    %63 = vrot.lane.b32.xlu0 %v47, 127
    %v64 = vpop.permute.xlu0 %63
    %65 = vrot.lane.b32.xlu0 %v48, 127
    %v66 = vpop.permute.xlu0 %65
    %67 = vrot.lane.b32.xlu0 %v49, 127
    %v68 = vpop.permute.xlu0 %67
    %vm69 = vcmask 1039360
    %v70 = vsel %vm69, %v58, %v60
    %v71 = vsel %vm69, %v60, %v62
    %v72 = vsel %vm69, %v62, %v64
    %v73 = vsel %vm69, %v64, %v66
    %v74 = vsel %vm69, %v66, %v68
    %75 = vrot.lane.b32.xlu0 %v44, 126
    %v76 = vpop.permute.xlu0 %75
    %77 = vrot.lane.b32.xlu0 %v45, 126
    %v78 = vpop.permute.xlu0 %77
    %79 = vrot.lane.b32.xlu0 %v46, 126
    %v80 = vpop.permute.xlu0 %79
    %81 = vrot.lane.b32.xlu0 %v47, 126
    %v82 = vpop.permute.xlu0 %81
    %83 = vrot.lane.b32.xlu0 %v48, 126
    %v84 = vpop.permute.xlu0 %83
    %85 = vrot.lane.b32.xlu0 %v49, 126
    %v86 = vpop.permute.xlu0 %85
    %vm87 = vcmask 1031168
    %v88 = vsel %vm87, %v76, %v78
    %v89 = vsel %vm87, %v78, %v80
    %v90 = vsel %vm87, %v80, %v82
    %v91 = vsel %vm87, %v82, %v84
    %v92 = vsel %vm87, %v84, %v86
    %94 = vrot.lane.b32.xlu0 %v44, 110
    %v95 = vpop.permute.xlu0 %94
    %96 = vrot.lane.b32.xlu0 %v45, 110
    %v97 = vpop.permute.xlu0 %96
    %98 = vrot.lane.b32.xlu0 %v46, 110
    %v99 = vpop.permute.xlu0 %98
    %100 = vrot.lane.b32.xlu0 %v47, 110
    %v101 = vpop.permute.xlu0 %100
    %102 = vrot.lane.b32.xlu0 %v48, 110
    %v103 = vpop.permute.xlu0 %102
    %104 = vrot.lane.b32.xlu0 %v49, 110
    %v105 = vpop.permute.xlu0 %104
    %106 = vrot.lane.b32.xlu0 %v50, 110
    %v107 = vpop.permute.xlu0 %106
    %vm108 = vcmask 900096
    %v109 = vsel %vm108, %v95, %v97
    %v110 = vsel %vm108, %v97, %v99
    %v111 = vsel %vm108, %v99, %v101
    %v112 = vsel %vm108, %v101, %v103
    %v113 = vsel %vm108, %v103, %v105
    %v114 = vsel %vm108, %v105, %v107
    %115 = vrot.lane.b32.xlu0 %v45, 109
    %v116 = vpop.permute.xlu0 %115
    %117 = vrot.lane.b32.xlu0 %v46, 109
    %v118 = vpop.permute.xlu0 %117
    %119 = vrot.lane.b32.xlu0 %v47, 109
    %v120 = vpop.permute.xlu0 %119
    %121 = vrot.lane.b32.xlu0 %v48, 109
    %v122 = vpop.permute.xlu0 %121
    %123 = vrot.lane.b32.xlu0 %v49, 109
    %v124 = vpop.permute.xlu0 %123
    %125 = vrot.lane.b32.xlu0 %v50, 109
    %v126 = vpop.permute.xlu0 %125
    %vm127 = vcmask 891904
    %v128 = vsel %vm127, %v116, %v118
    %v129 = vsel %vm127, %v118, %v120
    %v130 = vsel %vm127, %v120, %v122
    %v131 = vsel %vm127, %v122, %v124
    %v132 = vsel %vm127, %v124, %v126
    %133 = vrot.lane.b32.xlu0 %v45, 108
    %v134 = vpop.permute.xlu0 %133
    %135 = vrot.lane.b32.xlu0 %v46, 108
    %v136 = vpop.permute.xlu0 %135
    %137 = vrot.lane.b32.xlu0 %v47, 108
    %v138 = vpop.permute.xlu0 %137
    %139 = vrot.lane.b32.xlu0 %v48, 108
    %v140 = vpop.permute.xlu0 %139
    %141 = vrot.lane.b32.xlu0 %v49, 108
    %v142 = vpop.permute.xlu0 %141
    %143 = vrot.lane.b32.xlu0 %v50, 108
    %v144 = vpop.permute.xlu0 %143
    %vm145 = vcmask 883712
    %v146 = vsel %vm145, %v134, %v136
    %v147 = vsel %vm145, %v136, %v138
    %v148 = vsel %vm145, %v138, %v140
    %v149 = vsel %vm145, %v140, %v142
    %v150 = vsel %vm145, %v142, %v144
    %151 = vrot.lane.b32.xlu0 %v45, 92
    %v152 = vpop.permute.xlu0 %151
    %153 = vrot.lane.b32.xlu0 %v46, 92
    %v154 = vpop.permute.xlu0 %153
    %155 = vrot.lane.b32.xlu0 %v47, 92
    %v156 = vpop.permute.xlu0 %155
    %157 = vrot.lane.b32.xlu0 %v48, 92
    %v158 = vpop.permute.xlu0 %157
    %159 = vrot.lane.b32.xlu0 %v49, 92
    %v160 = vpop.permute.xlu0 %159
    %161 = vrot.lane.b32.xlu0 %v50, 92
    %v162 = vpop.permute.xlu0 %161
    %vm163 = vcmask 752640
    %v164 = vsel %vm163, %v152, %v154
    %v165 = vsel %vm163, %v154, %v156
    %v166 = vsel %vm163, %v156, %v158
    %v167 = vsel %vm163, %v158, %v160
    %v168 = vsel %vm163, %v160, %v162
    %169 = vrot.lane.b32.xlu0 %v45, 91
    %v170 = vpop.permute.xlu0 %169
    %171 = vrot.lane.b32.xlu0 %v46, 91
    %v172 = vpop.permute.xlu0 %171
    %173 = vrot.lane.b32.xlu0 %v47, 91
    %v174 = vpop.permute.xlu0 %173
    %175 = vrot.lane.b32.xlu0 %v48, 91
    %v176 = vpop.permute.xlu0 %175
    %177 = vrot.lane.b32.xlu0 %v49, 91
    %v178 = vpop.permute.xlu0 %177
    %179 = vrot.lane.b32.xlu0 %v50, 91
    %v180 = vpop.permute.xlu0 %179
    %vm181 = vcmask 744448
    %v182 = vsel %vm181, %v170, %v172
    %v183 = vsel %vm181, %v172, %v174
    %v184 = vsel %vm181, %v174, %v176
    %v185 = vsel %vm181, %v176, %v178
    %v186 = vsel %vm181, %v178, %v180
    %187 = vrot.lane.b32.xlu0 %v45, 90
    %v188 = vpop.permute.xlu0 %187
    %189 = vrot.lane.b32.xlu0 %v46, 90
    %v190 = vpop.permute.xlu0 %189
    %191 = vrot.lane.b32.xlu0 %v47, 90
    %v192 = vpop.permute.xlu0 %191
    %193 = vrot.lane.b32.xlu0 %v48, 90
    %v194 = vpop.permute.xlu0 %193
    %195 = vrot.lane.b32.xlu0 %v49, 90
    %v196 = vpop.permute.xlu0 %195
    %197 = vrot.lane.b32.xlu0 %v50, 90
    %v198 = vpop.permute.xlu0 %197
    %vm199 = vcmask 736256
    %v200 = vsel %vm199, %v188, %v190
    %v201 = vsel %vm199, %v190, %v192
    %v202 = vsel %vm199, %v192, %v194
    %v203 = vsel %vm199, %v194, %v196
    %v204 = vsel %vm199, %v196, %v198
    %v205 = vld [vmem:[%s2] sm:$0xff]
    %206 = vrot.lane.b32.xlu0 %v44, 19
    %v207 = vpop.permute.xlu0 %206
    %208 = vrot.lane.b32.xlu0 %v45, 19
    %v209 = vpop.permute.xlu0 %208
    %210 = vrot.lane.b32.xlu0 %v46, 19
    %v211 = vpop.permute.xlu0 %210
    %212 = vrot.lane.b32.xlu0 %v47, 19
    %v213 = vpop.permute.xlu0 %212
    %214 = vrot.lane.b32.xlu0 %v48, 19
    %v215 = vpop.permute.xlu0 %214
    %216 = vrot.lane.b32.xlu0 %v49, 19
    %v217 = vpop.permute.xlu0 %216
    %218 = vrot.lane.b32.xlu0 %v70, 19
    %v219 = vpop.permute.xlu0 %218
    %220 = vrot.lane.b32.xlu0 %v71, 19
    %v221 = vpop.permute.xlu0 %220
    %222 = vrot.lane.b32.xlu0 %v72, 19
    %v223 = vpop.permute.xlu0 %222
    %224 = vrot.lane.b32.xlu0 %v73, 19
    %v225 = vpop.permute.xlu0 %224
    %226 = vrot.lane.b32.xlu0 %v74, 19
    %v227 = vpop.permute.xlu0 %226
    %228 = vrot.lane.b32.xlu0 %v68, 19
    %v229 = vpop.permute.xlu0 %228
    %230 = vrot.lane.b32.xlu0 %v88, 19
    %v231 = vpop.permute.xlu0 %230
    %232 = vrot.lane.b32.xlu0 %v89, 19
    %v233 = vpop.permute.xlu0 %232
    %234 = vrot.lane.b32.xlu0 %v90, 19
    %v235 = vpop.permute.xlu0 %234
    %236 = vrot.lane.b32.xlu0 %v91, 19
    %v237 = vpop.permute.xlu0 %236
    %238 = vrot.lane.b32.xlu0 %v92, 19
    %v239 = vpop.permute.xlu0 %238
    %240 = vrot.lane.b32.xlu0 %v86, 19
    %v241 = vpop.permute.xlu0 %240
    %242 = vrot.lane.b32.xlu0 %v109, 19
    %v243 = vpop.permute.xlu0 %242
    %244 = vrot.lane.b32.xlu0 %v110, 19
    %v245 = vpop.permute.xlu0 %244
    %246 = vrot.lane.b32.xlu0 %v111, 19
    %v247 = vpop.permute.xlu0 %246
    %248 = vrot.lane.b32.xlu0 %v112, 19
    %v249 = vpop.permute.xlu0 %248
    %250 = vrot.lane.b32.xlu0 %v113, 19
    %v251 = vpop.permute.xlu0 %250
    %252 = vrot.lane.b32.xlu0 %v114, 19
    %v253 = vpop.permute.xlu0 %252
    %254 = vrot.lane.b32.xlu0 %v116, 19
    %v255 = vpop.permute.xlu0 %254
    %256 = vrot.lane.b32.xlu0 %v128, 19
    %v257 = vpop.permute.xlu0 %256
    %258 = vrot.lane.b32.xlu0 %v129, 19
    %v259 = vpop.permute.xlu0 %258
    %260 = vrot.lane.b32.xlu0 %v130, 19
    %v261 = vpop.permute.xlu0 %260
    %262 = vrot.lane.b32.xlu0 %v131, 19
    %v263 = vpop.permute.xlu0 %262
    %264 = vrot.lane.b32.xlu0 %v132, 19
    %v265 = vpop.permute.xlu0 %264
    %266 = vrot.lane.b32.xlu0 %v134, 19
    %v267 = vpop.permute.xlu0 %266
    %268 = vrot.lane.b32.xlu0 %v146, 19
    %v269 = vpop.permute.xlu0 %268
    %270 = vrot.lane.b32.xlu0 %v147, 19
    %v271 = vpop.permute.xlu0 %270
    %272 = vrot.lane.b32.xlu0 %v148, 19
    %v273 = vpop.permute.xlu0 %272
    %274 = vrot.lane.b32.xlu0 %v149, 19
    %v275 = vpop.permute.xlu0 %274
    %276 = vrot.lane.b32.xlu0 %v150, 19
    %v277 = vpop.permute.xlu0 %276
    %278 = vrot.lane.b32.xlu0 %v152, 19
    %v279 = vpop.permute.xlu0 %278
    %280 = vrot.lane.b32.xlu0 %v164, 19
    %v281 = vpop.permute.xlu0 %280
    %282 = vrot.lane.b32.xlu0 %v165, 19
    %v283 = vpop.permute.xlu0 %282
    %284 = vrot.lane.b32.xlu0 %v166, 19
    %v285 = vpop.permute.xlu0 %284
    %286 = vrot.lane.b32.xlu0 %v167, 19
    %v287 = vpop.permute.xlu0 %286
    %288 = vrot.lane.b32.xlu0 %v168, 19
    %v289 = vpop.permute.xlu0 %288
    %290 = vrot.lane.b32.xlu0 %v170, 19
    %v291 = vpop.permute.xlu0 %290
    %292 = vrot.lane.b32.xlu0 %v182, 19
    %v293 = vpop.permute.xlu0 %292
    %294 = vrot.lane.b32.xlu0 %v183, 19
    %v295 = vpop.permute.xlu0 %294
    %296 = vrot.lane.b32.xlu0 %v184, 19
    %v297 = vpop.permute.xlu0 %296
    %298 = vrot.lane.b32.xlu0 %v185, 19
    %v299 = vpop.permute.xlu0 %298
    %300 = vrot.lane.b32.xlu0 %v186, 19
    %v301 = vpop.permute.xlu0 %300
    %302 = vrot.lane.b32.xlu0 %v188, 19
    %v303 = vpop.permute.xlu0 %302
    %304 = vrot.lane.b32.xlu0 %v200, 19
    %v305 = vpop.permute.xlu0 %304
    %306 = vrot.lane.b32.xlu0 %v201, 19
    %v307 = vpop.permute.xlu0 %306
    %308 = vrot.lane.b32.xlu0 %v202, 19
    %v309 = vpop.permute.xlu0 %308
    %310 = vrot.lane.b32.xlu0 %v203, 19
    %v311 = vpop.permute.xlu0 %310
    %312 = vrot.lane.b32.xlu0 %v204, 19
    %v313 = vpop.permute.xlu0 %312
    %vm314 = vcmask 154624
    %v315 = vsel %vm314, %v207, %v209
    %v316 = vsel %vm314, %v209, %v211
    %v317 = vsel %vm314, %v211, %v213
    %v318 = vsel %vm314, %v213, %v215
    %v319 = vsel %vm314, %v215, %v217
    %v320 = vsel %vm314, %v219, %v221
    %v321 = vsel %vm314, %v221, %v223
    %v322 = vsel %vm314, %v223, %v225
    %v323 = vsel %vm314, %v225, %v227
    %v324 = vsel %vm314, %v227, %v229
    %v325 = vsel %vm314, %v231, %v233
    %v326 = vsel %vm314, %v233, %v235
    %v327 = vsel %vm314, %v235, %v237
    %v328 = vsel %vm314, %v237, %v239
    %v329 = vsel %vm314, %v239, %v241
    %v330 = vsel %vm314, %v243, %v245
    %v331 = vsel %vm314, %v245, %v247
    %v332 = vsel %vm314, %v247, %v249
    %v333 = vsel %vm314, %v249, %v251
    %v334 = vsel %vm314, %v251, %v253
    %v335 = vsel %vm314, %v255, %v257
    %v336 = vsel %vm314, %v257, %v259
    %v337 = vsel %vm314, %v259, %v261
    %v338 = vsel %vm314, %v261, %v263
    %v339 = vsel %vm314, %v263, %v265
    %v340 = vsel %vm314, %v267, %v269
    %v341 = vsel %vm314, %v269, %v271
    %v342 = vsel %vm314, %v271, %v273
    %v343 = vsel %vm314, %v273, %v275
    %v344 = vsel %vm314, %v275, %v277
    %v345 = vsel %vm314, %v279, %v281
    %v346 = vsel %vm314, %v281, %v283
    %v347 = vsel %vm314, %v283, %v285
    %v348 = vsel %vm314, %v285, %v287
    %v349 = vsel %vm314, %v287, %v289
    %v350 = vsel %vm314, %v291, %v293
    %v351 = vsel %vm314, %v293, %v295
    %v352 = vsel %vm314, %v295, %v297
    %v353 = vsel %vm314, %v297, %v299
    %v354 = vsel %vm314, %v299, %v301
    %v355 = vsel %vm314, %v303, %v305
    %v356 = vsel %vm314, %v305, %v307
    %v357 = vsel %vm314, %v307, %v309
    %v358 = vsel %vm314, %v309, %v311
    %v359 = vsel %vm314, %v311, %v313
    %vm414 = vcmask 588800
    %v416 = vsel %vm414, %v205, 0
    %418 = vmatprep.subr.mxu0 %v316
    %419 = vmatpush1.msra.mxu0 %v315
    %420 = vmatprep.subr.mxu0 %v321
    %421 = vmatpush1.msra.mxu0 %v320
    %422 = vmatprep.subr.mxu0 %v326
    %423 = vmatpush1.msra.mxu0 %v325
    %424 = vmatprep.subr.mxu0 %v331
    %425 = vmatpush1.msra.mxu0 %v330
    %426 = vmatprep.subr.mxu0 %v336
    %427 = vmatpush1.msra.mxu0 %v335
    %428 = vmatprep.subr.mxu0 %v341
    %429 = vmatpush1.msra.mxu0 %v340
    %430 = vmatprep.subr.mxu0 %v346
    %431 = vmatpush1.msra.mxu0 %v345
    %432 = vmatprep.subr.mxu0 %v351
    %433 = vmatpush1.msra.mxu0 %v350
    %434 = vmatprep.subr.mxu0 %v356
    %435 = vmatpush1.msra.mxu0 %v355
    %436 = vmatprep.subr.mxu0 0.0
    %437 = vmatpush1.msra.mxu0 0.0
    %438 = vmatprep.subr.mxu0 0.0
    %439 = vmatpush1.msra.mxu0 0.0
    %440 = vmatprep.subr.mxu0 0.0
    %441 = vmatpush1.msra.mxu0 0.0
    %442 = vmatprep.subr.mxu0 0.0
    %443 = vmatpush1.msra.mxu0 0.0
    %444 = vmatprep.subr.mxu0 0.0
    %445 = vmatpush1.msra.mxu0 0.0
    %446 = vmatprep.subr.mxu0 0.0
    %447 = vmatpush1.msra.mxu0 0.0
    %448 = vmatprep.subr.mxu0 0.0
    %449 = vmatpush1.msra.mxu0 0.0
    %450 = vmatprep.subr.mxu0 0.0
    %451 = vmatpush1.msra.mxu0 0.0
    %452 = vmatprep.subr.mxu0 0.0
    %453 = vmatpush1.msra.mxu0 0.0
    %454 = vmatprep.subr.mxu0 0.0
    %455 = vmatpush1.msra.mxu0 0.0
    %456 = vmatprep.subr.mxu0 0.0
    %457 = vmatpush1.msra.mxu0 0.0
    %458 = vmatprep.subr.mxu0 0.0
    %459 = vmatpush1.msra.mxu0 0.0
    %460 = vmatprep.subr.mxu0 0.0
    %461 = vmatpush1.msra.mxu0 0.0
    %462 = vmatprep.subr.mxu0 0.0
    %463 = vmatpush1.msra.mxu0 0.0
    %464 = vmatprep.subr.mxu0 0.0
    %465 = vmatpush1.msra.mxu0 0.0
    %466 = vmatprep.subr.mxu0 0.0
    %467 = vmatpush1.msra.mxu0 0.0
    %468 = vmatprep.subr.mxu0 0.0
    %469 = vmatpush1.msra.mxu0 0.0
    %470 = vmatprep.subr.mxu0 0.0
    %471 = vmatpush1.msra.mxu0 0.0
    %472 = vmatprep.subr.mxu0 0.0
    %473 = vmatpush1.msra.mxu0 0.0
    %474 = vmatprep.subr.mxu0 0.0
    %475 = vmatpush1.msra.mxu0 0.0
    %476 = vmatprep.subr.mxu0 0.0
    %477 = vmatpush1.msra.mxu0 0.0
    %478 = vmatprep.subr.mxu0 0.0
    %479 = vmatpush1.msra.mxu0 0.0
    %480 = vmatprep.subr.mxu0 0.0
    %481 = vmatpush1.msra.mxu0 0.0
    %482 = vmatprep.mubr.f32.mxu0 0.0
    %483 = vmatmul.mubr.f32.gmra.mrb[0].mxu0 %v416
    %v484 = vpop.f32.mrb[0].mxu0
    %v485 = vadd.f32 0.0, %v484
    %v486 = vpop.f32.mrb[0].mxu0
    %v487 = vadd.f32 0.0, %v486
    %488 = vdwg.mxu0
    %489 = vmatprep.subr.mxu0 %v318
    %490 = vmatpush1.msra.mxu0 %v317
    %491 = vmatprep.subr.mxu0 %v323
    %492 = vmatpush1.msra.mxu0 %v322
    %493 = vmatprep.subr.mxu0 %v328
    %494 = vmatpush1.msra.mxu0 %v327
    %495 = vmatprep.subr.mxu0 %v333
    %496 = vmatpush1.msra.mxu0 %v332
    %497 = vmatprep.subr.mxu0 %v338
    %498 = vmatpush1.msra.mxu0 %v337
    %499 = vmatprep.subr.mxu0 %v343
    %500 = vmatpush1.msra.mxu0 %v342
    %501 = vmatprep.subr.mxu0 %v348
    %502 = vmatpush1.msra.mxu0 %v347
    %503 = vmatprep.subr.mxu0 %v353
    %504 = vmatpush1.msra.mxu0 %v352
    %505 = vmatprep.subr.mxu0 %v358
    %506 = vmatpush1.msra.mxu0 %v357
    %507 = vmatprep.subr.mxu0 0.0
    %508 = vmatpush1.msra.mxu0 0.0
    %509 = vmatprep.subr.mxu0 0.0
    %510 = vmatpush1.msra.mxu0 0.0
    %511 = vmatprep.subr.mxu0 0.0
    %512 = vmatpush1.msra.mxu0 0.0
    %513 = vmatprep.subr.mxu0 0.0
    %514 = vmatpush1.msra.mxu0 0.0
    %515 = vmatprep.subr.mxu0 0.0
    %516 = vmatpush1.msra.mxu0 0.0
    %517 = vmatprep.subr.mxu0 0.0
    %518 = vmatpush1.msra.mxu0 0.0
    %519 = vmatprep.subr.mxu0 0.0
    %520 = vmatpush1.msra.mxu0 0.0
    %521 = vmatprep.subr.mxu0 0.0
    %522 = vmatpush1.msra.mxu0 0.0
    %523 = vmatprep.subr.mxu0 0.0
    %524 = vmatpush1.msra.mxu0 0.0
    %525 = vmatprep.subr.mxu0 0.0
    %526 = vmatpush1.msra.mxu0 0.0
    %527 = vmatprep.subr.mxu0 0.0
    %528 = vmatpush1.msra.mxu0 0.0
    %529 = vmatprep.subr.mxu0 0.0
    %530 = vmatpush1.msra.mxu0 0.0
    %531 = vmatprep.subr.mxu0 0.0
    %532 = vmatpush1.msra.mxu0 0.0
    %533 = vmatprep.subr.mxu0 0.0
    %534 = vmatpush1.msra.mxu0 0.0
    %535 = vmatprep.subr.mxu0 0.0
    %536 = vmatpush1.msra.mxu0 0.0
    %537 = vmatprep.subr.mxu0 0.0
    %538 = vmatpush1.msra.mxu0 0.0
    %539 = vmatprep.subr.mxu0 0.0
    %540 = vmatpush1.msra.mxu0 0.0
    %541 = vmatprep.subr.mxu0 0.0
    %542 = vmatpush1.msra.mxu0 0.0
    %543 = vmatprep.subr.mxu0 0.0
    %544 = vmatpush1.msra.mxu0 0.0
    %545 = vmatprep.subr.mxu0 0.0
    %546 = vmatpush1.msra.mxu0 0.0
    %547 = vmatprep.subr.mxu0 0.0
    %548 = vmatpush1.msra.mxu0 0.0
    %549 = vmatprep.subr.mxu0 0.0
    %550 = vmatpush1.msra.mxu0 0.0
    %551 = vmatprep.subr.mxu0 0.0
    %552 = vmatpush1.msra.mxu0 0.0
    %553 = vmatprep.mubr.f32.mxu0 0.0
    %554 = vmatmul.mubr.f32.gmra.mrb[0].mxu0 %v416
    %v555 = vpop.f32.mrb[0].mxu0
    %v556 = vadd.f32 0.0, %v555
    %v557 = vpop.f32.mrb[0].mxu0
    %v558 = vadd.f32 0.0, %v557
    %559 = vdwg.mxu0
    %560 = vmatprep.subr.mxu0 %v217
    %561 = vmatpush1.msra.mxu0 %v319
    %562 = vmatprep.subr.mxu0 %v229
    %563 = vmatpush1.msra.mxu0 %v324
    %564 = vmatprep.subr.mxu0 %v241
    %565 = vmatpush1.msra.mxu0 %v329
    %566 = vmatprep.subr.mxu0 %v253
    %567 = vmatpush1.msra.mxu0 %v334
    %568 = vmatprep.subr.mxu0 %v265
    %569 = vmatpush1.msra.mxu0 %v339
    %570 = vmatprep.subr.mxu0 %v277
    %571 = vmatpush1.msra.mxu0 %v344
    %572 = vmatprep.subr.mxu0 %v289
    %573 = vmatpush1.msra.mxu0 %v349
    %574 = vmatprep.subr.mxu0 %v301
    %575 = vmatpush1.msra.mxu0 %v354
    %576 = vmatprep.subr.mxu0 %v313
    %577 = vmatpush1.msra.mxu0 %v359
    %578 = vmatprep.subr.mxu0 0.0
    %579 = vmatpush1.msra.mxu0 0.0
    %580 = vmatprep.subr.mxu0 0.0
    %581 = vmatpush1.msra.mxu0 0.0
    %582 = vmatprep.subr.mxu0 0.0
    %583 = vmatpush1.msra.mxu0 0.0
    %584 = vmatprep.subr.mxu0 0.0
    %585 = vmatpush1.msra.mxu0 0.0
    %586 = vmatprep.subr.mxu0 0.0
    %587 = vmatpush1.msra.mxu0 0.0
    %588 = vmatprep.subr.mxu0 0.0
    %589 = vmatpush1.msra.mxu0 0.0
    %590 = vmatprep.subr.mxu0 0.0
    %591 = vmatpush1.msra.mxu0 0.0
    %592 = vmatprep.subr.mxu0 0.0
    %593 = vmatpush1.msra.mxu0 0.0
    %594 = vmatprep.subr.mxu0 0.0
    %595 = vmatpush1.msra.mxu0 0.0
    %596 = vmatprep.subr.mxu0 0.0
    %597 = vmatpush1.msra.mxu0 0.0
    %598 = vmatprep.subr.mxu0 0.0
    %599 = vmatpush1.msra.mxu0 0.0
    %600 = vmatprep.subr.mxu0 0.0
    %601 = vmatpush1.msra.mxu0 0.0
    %602 = vmatprep.subr.mxu0 0.0
    %603 = vmatpush1.msra.mxu0 0.0
    %604 = vmatprep.subr.mxu0 0.0
    %605 = vmatpush1.msra.mxu0 0.0
    %606 = vmatprep.subr.mxu0 0.0
    %607 = vmatpush1.msra.mxu0 0.0
    %608 = vmatprep.subr.mxu0 0.0
    %609 = vmatpush1.msra.mxu0 0.0
    %610 = vmatprep.subr.mxu0 0.0
    %611 = vmatpush1.msra.mxu0 0.0
    %612 = vmatprep.subr.mxu0 0.0
    %613 = vmatpush1.msra.mxu0 0.0
    %614 = vmatprep.subr.mxu0 0.0
    %615 = vmatpush1.msra.mxu0 0.0
    %616 = vmatprep.subr.mxu0 0.0
    %617 = vmatpush1.msra.mxu0 0.0
    %618 = vmatprep.subr.mxu0 0.0
    %619 = vmatpush1.msra.mxu0 0.0
    %620 = vmatprep.subr.mxu0 0.0
    %621 = vmatpush1.msra.mxu0 0.0
    %622 = vmatprep.subr.mxu0 0.0
    %623 = vmatpush1.msra.mxu0 0.0
    %624 = vmatprep.mubr.f32.mxu0 0.0
    %625 = vmatmul.mubr.f32.gmra.mrb[0].mxu0 %v416
    %v626 = vpop.f32.mrb[0].mxu0
    %v627 = vadd.f32 0.0, %v626
    %v628 = vpop.f32.mrb[0].mxu0
    %v629 = vadd.f32 0.0, %v628
    %630 = vdwg.mxu0
    %v631 = vld [vmem:[%s3] sm:$0xff]
    %v632 = vld [vmem:[%s4] sm:$0xff]
    %v633 = vsel %vm43, 1, 0
    %v634 = vlaneseq
    %v635 = vshrl.u32 %v634, 7
    %v636 = vsub.s32 0, %v635
    %v637 = vrot.slane %v633, %v636
    %v638 = vlaneseq
    %v639 = vshrl.u32 %v638, 7
    %v640 = vsub.s32 1, %v639
    %v641 = vrot.slane %v633, %v640
    %v642 = vlaneseq
    %v643 = vshrl.u32 %v642, 7
    %v644 = vsub.s32 2, %v643
    %v645 = vrot.slane %v633, %v644
    %v646 = vlaneseq
    %v647 = vshrl.u32 %v646, 7
    %v648 = vsub.s32 3, %v647
    %v649 = vrot.slane %v633, %v648
    %v650 = vlaneseq
    %v651 = vshrl.u32 %v650, 7
    %v652 = vsub.s32 4, %v651
    %v653 = vrot.slane %v633, %v652
    %v654 = vlaneseq
    %v655 = vshrl.u32 %v654, 7
    %v656 = vsub.s32 5, %v655
    %v657 = vrot.slane %v633, %v656
    %vm658 = vcmp.eq.s32.totalorder %v637, 1
    %vm659 = vcmp.eq.s32.totalorder %v641, 1
    %vm660 = vcmp.eq.s32.totalorder %v645, 1
    %vm661 = vcmp.eq.s32.totalorder %v649, 1
    %vm662 = vcmp.eq.s32.totalorder %v653, 1
    %vm663 = vcmp.eq.s32.totalorder %v657, 1
    %v664 = vsel %vm658, %v485, 0.0
    %v665 = vsel %vm659, %v487, 0.0
    %v666 = vsel %vm660, %v556, 0.0
    %v667 = vsel %vm661, %v558, 0.0
    %v668 = vsel %vm662, %v627, 0.0
    %v669 = vsel %vm663, %v629, 0.0
    %v670 = vadd.f32 %v664, %v665
    %v671 = vadd.f32 %v670, %v666
    %v672 = vadd.f32 %v671, %v667
    %v673 = vadd.f32 %v672, %v668
    %vm674 = vcmask 64512
    %v675 = vsel %vm674, %v669, 0.0
    %v676 = vadd.f32 %v673, %v675
    %677 = vadd.xlane.f32.xlu0 %v676
    %v678 = vpop.xlane.xlu0 %677
    %v679 = vmul.f32 %v678, 0.001953125
    %v680 = vmul.f32 %v664, %v664
    %v681 = vmul.f32 %v665, %v665
    %v682 = vmul.f32 %v666, %v666
    %v683 = vmul.f32 %v667, %v667
    %v684 = vmul.f32 %v668, %v668
    %v685 = vmul.f32 %v669, %v669
    %v686 = vadd.f32 %v680, %v681
    %v687 = vadd.f32 %v686, %v682
    %v688 = vadd.f32 %v687, %v683
    %v689 = vadd.f32 %v688, %v684
    %v690 = vsel %vm674, %v685, 0.0
    %v691 = vadd.f32 %v689, %v690
    %692 = vadd.xlane.f32.xlu0 %v691
    %v693 = vpop.xlane.xlu0 %692
    %v694 = vmul.f32 %v693, 0.001953125
    %v695 = vmul.f32 %v679, %v679
    %v696 = vsub.f32 %v694, %v695
    %v697 = vadd.f32 %v696, 1e-05
    %v698 = vrsqrt.pop %v697
    %v699 = vmul.f32 %v631, %v698
    %v700 = vmul.f32 %v679, %v699
    %v701 = vsub.f32 %v632, %v700
    %703 = vset.pattern.permute.xlu0 0
    %704 = vperm.xlu0 %703, %v699
    %v705 = vpop.permute.xlu0 %704
    %v707 = vmul.f32 %v485, %v705
    %v708 = vmul.f32 %v487, %v705
    %v709 = vmul.f32 %v556, %v705
    %v710 = vmul.f32 %v558, %v705
    %v711 = vmul.f32 %v627, %v705
    %v712 = vmul.f32 %v629, %v705
    %714 = vset.pattern.permute.xlu0 0
    %715 = vperm.xlu0 %714, %v701
    %v716 = vpop.permute.xlu0 %715
    %v718 = vadd.f32 %v707, %v716
    %v719 = vadd.f32 %v708, %v716
    %v720 = vadd.f32 %v709, %v716
    %v721 = vadd.f32 %v710, %v716
    %v722 = vadd.f32 %v711, %v716
    %v723 = vadd.f32 %v712, %v716
    %v724 = vmax.f32 %v718, 0.0
    %v725 = vmax.f32 %v719, 0.0
    %v726 = vmax.f32 %v720, 0.0
    %v727 = vmax.f32 %v721, 0.0
    %v728 = vmax.f32 %v722, 0.0
    %v729 = vmax.f32 %v723, 0.0
    %v730 = vsel %vm658, %v724, 0.0
    %v731 = vsel %vm659, %v725, 0.0
    %v732 = vsel %vm660, %v726, 0.0
    %v733 = vsel %vm661, %v727, 0.0
    %v734 = vsel %vm662, %v728, 0.0
    %v735 = vsel %vm663, %v729, 0.0
    %736 = vst [vmem:[#allocation2] sm:$0xff] 0.0
    %vm737 = vcmask 1047616
    %738 = vst.msk [vmem:[#allocation2 + $0x30] sm:$0xff] %vm737, 0.0
    %739 = vst.msk [vmem:[#allocation2 + $0x38] sm:$0xff] %vm674, 0.0
    %740 = vst [vmem:[#allocation2 + $0x8] sm:$0xff] %v730
    %741 = vst [vmem:[#allocation2 + $0x10] sm:$0xff] %v731
    %742 = vst [vmem:[#allocation2 + $0x18] sm:$0xff] %v732
    %743 = vst [vmem:[#allocation2 + $0x20] sm:$0xff] %v733
    %744 = vst [vmem:[#allocation2 + $0x28] sm:$0xff] %v734
    %745 = vst.msk [vmem:[#allocation2 + $0x30] sm:$0xff] %vm674, %v735
    %v746 = vld [vmem:[#allocation2] sm:$0xff]
    %v747 = vld [vmem:[#allocation2 + $0x8] sm:$0xff]
    %v748 = vld [vmem:[#allocation2 + $0x10] sm:$0xff]
    %v749 = vld [vmem:[#allocation2 + $0x18] sm:$0xff]
    %v750 = vld [vmem:[#allocation2 + $0x20] sm:$0xff]
    %v751 = vld [vmem:[#allocation2 + $0x28] sm:$0xff]
    %v752 = vld [vmem:[#allocation2 + $0x30] sm:$0xff]
    %759 = vrot.lane.b32.xlu0 %v746, 127
    %v760 = vpop.permute.xlu0 %759
    %761 = vrot.lane.b32.xlu0 %v747, 127
    %v762 = vpop.permute.xlu0 %761
    %763 = vrot.lane.b32.xlu0 %v748, 127
    %v764 = vpop.permute.xlu0 %763
    %765 = vrot.lane.b32.xlu0 %v749, 127
    %v766 = vpop.permute.xlu0 %765
    %767 = vrot.lane.b32.xlu0 %v750, 127
    %v768 = vpop.permute.xlu0 %767
    %769 = vrot.lane.b32.xlu0 %v751, 127
    %v770 = vpop.permute.xlu0 %769
    %v771 = vsel %vm69, %v760, %v762
    %v772 = vsel %vm69, %v762, %v764
    %v773 = vsel %vm69, %v764, %v766
    %v774 = vsel %vm69, %v766, %v768
    %v775 = vsel %vm69, %v768, %v770
    %776 = vrot.lane.b32.xlu0 %v746, 126
    %v777 = vpop.permute.xlu0 %776
    %778 = vrot.lane.b32.xlu0 %v747, 126
    %v779 = vpop.permute.xlu0 %778
    %780 = vrot.lane.b32.xlu0 %v748, 126
    %v781 = vpop.permute.xlu0 %780
    %782 = vrot.lane.b32.xlu0 %v749, 126
    %v783 = vpop.permute.xlu0 %782
    %784 = vrot.lane.b32.xlu0 %v750, 126
    %v785 = vpop.permute.xlu0 %784
    %786 = vrot.lane.b32.xlu0 %v751, 126
    %v787 = vpop.permute.xlu0 %786
    %v788 = vsel %vm87, %v777, %v779
    %v789 = vsel %vm87, %v779, %v781
    %v790 = vsel %vm87, %v781, %v783
    %v791 = vsel %vm87, %v783, %v785
    %v792 = vsel %vm87, %v785, %v787
    %794 = vrot.lane.b32.xlu0 %v746, 110
    %v795 = vpop.permute.xlu0 %794
    %796 = vrot.lane.b32.xlu0 %v747, 110
    %v797 = vpop.permute.xlu0 %796
    %798 = vrot.lane.b32.xlu0 %v748, 110
    %v799 = vpop.permute.xlu0 %798
    %800 = vrot.lane.b32.xlu0 %v749, 110
    %v801 = vpop.permute.xlu0 %800
    %802 = vrot.lane.b32.xlu0 %v750, 110
    %v803 = vpop.permute.xlu0 %802
    %804 = vrot.lane.b32.xlu0 %v751, 110
    %v805 = vpop.permute.xlu0 %804
    %806 = vrot.lane.b32.xlu0 %v752, 110
    %v807 = vpop.permute.xlu0 %806
    %v808 = vsel %vm108, %v795, %v797
    %v809 = vsel %vm108, %v797, %v799
    %v810 = vsel %vm108, %v799, %v801
    %v811 = vsel %vm108, %v801, %v803
    %v812 = vsel %vm108, %v803, %v805
    %v813 = vsel %vm108, %v805, %v807
    %814 = vrot.lane.b32.xlu0 %v747, 109
    %v815 = vpop.permute.xlu0 %814
    %816 = vrot.lane.b32.xlu0 %v748, 109
    %v817 = vpop.permute.xlu0 %816
    %818 = vrot.lane.b32.xlu0 %v749, 109
    %v819 = vpop.permute.xlu0 %818
    %820 = vrot.lane.b32.xlu0 %v750, 109
    %v821 = vpop.permute.xlu0 %820
    %822 = vrot.lane.b32.xlu0 %v751, 109
    %v823 = vpop.permute.xlu0 %822
    %824 = vrot.lane.b32.xlu0 %v752, 109
    %v825 = vpop.permute.xlu0 %824
    %v826 = vsel %vm127, %v815, %v817
    %v827 = vsel %vm127, %v817, %v819
    %v828 = vsel %vm127, %v819, %v821
    %v829 = vsel %vm127, %v821, %v823
    %v830 = vsel %vm127, %v823, %v825
    %831 = vrot.lane.b32.xlu0 %v747, 108
    %v832 = vpop.permute.xlu0 %831
    %833 = vrot.lane.b32.xlu0 %v748, 108
    %v834 = vpop.permute.xlu0 %833
    %835 = vrot.lane.b32.xlu0 %v749, 108
    %v836 = vpop.permute.xlu0 %835
    %837 = vrot.lane.b32.xlu0 %v750, 108
    %v838 = vpop.permute.xlu0 %837
    %839 = vrot.lane.b32.xlu0 %v751, 108
    %v840 = vpop.permute.xlu0 %839
    %841 = vrot.lane.b32.xlu0 %v752, 108
    %v842 = vpop.permute.xlu0 %841
    %v843 = vsel %vm145, %v832, %v834
    %v844 = vsel %vm145, %v834, %v836
    %v845 = vsel %vm145, %v836, %v838
    %v846 = vsel %vm145, %v838, %v840
    %v847 = vsel %vm145, %v840, %v842
    %848 = vrot.lane.b32.xlu0 %v747, 92
    %v849 = vpop.permute.xlu0 %848
    %850 = vrot.lane.b32.xlu0 %v748, 92
    %v851 = vpop.permute.xlu0 %850
    %852 = vrot.lane.b32.xlu0 %v749, 92
    %v853 = vpop.permute.xlu0 %852
    %854 = vrot.lane.b32.xlu0 %v750, 92
    %v855 = vpop.permute.xlu0 %854
    %856 = vrot.lane.b32.xlu0 %v751, 92
    %v857 = vpop.permute.xlu0 %856
    %858 = vrot.lane.b32.xlu0 %v752, 92
    %v859 = vpop.permute.xlu0 %858
    %v860 = vsel %vm163, %v849, %v851
    %v861 = vsel %vm163, %v851, %v853
    %v862 = vsel %vm163, %v853, %v855
    %v863 = vsel %vm163, %v855, %v857
    %v864 = vsel %vm163, %v857, %v859
    %865 = vrot.lane.b32.xlu0 %v747, 91
    %v866 = vpop.permute.xlu0 %865
    %867 = vrot.lane.b32.xlu0 %v748, 91
    %v868 = vpop.permute.xlu0 %867
    %869 = vrot.lane.b32.xlu0 %v749, 91
    %v870 = vpop.permute.xlu0 %869
    %871 = vrot.lane.b32.xlu0 %v750, 91
    %v872 = vpop.permute.xlu0 %871
    %873 = vrot.lane.b32.xlu0 %v751, 91
    %v874 = vpop.permute.xlu0 %873
    %875 = vrot.lane.b32.xlu0 %v752, 91
    %v876 = vpop.permute.xlu0 %875
    %v877 = vsel %vm181, %v866, %v868
    %v878 = vsel %vm181, %v868, %v870
    %v879 = vsel %vm181, %v870, %v872
    %v880 = vsel %vm181, %v872, %v874
    %v881 = vsel %vm181, %v874, %v876
    %882 = vrot.lane.b32.xlu0 %v747, 90
    %v883 = vpop.permute.xlu0 %882
    %884 = vrot.lane.b32.xlu0 %v748, 90
    %v885 = vpop.permute.xlu0 %884
    %886 = vrot.lane.b32.xlu0 %v749, 90
    %v887 = vpop.permute.xlu0 %886
    %888 = vrot.lane.b32.xlu0 %v750, 90
    %v889 = vpop.permute.xlu0 %888
    %890 = vrot.lane.b32.xlu0 %v751, 90
    %v891 = vpop.permute.xlu0 %890
    %892 = vrot.lane.b32.xlu0 %v752, 90
    %v893 = vpop.permute.xlu0 %892
    %v894 = vsel %vm199, %v883, %v885
    %v895 = vsel %vm199, %v885, %v887
    %v896 = vsel %vm199, %v887, %v889
    %v897 = vsel %vm199, %v889, %v891
    %v898 = vsel %vm199, %v891, %v893
    %v899 = vld [vmem:[%s5] sm:$0xff]
    %900 = vrot.lane.b32.xlu0 %v746, 19
    %v901 = vpop.permute.xlu0 %900
    %902 = vrot.lane.b32.xlu0 %v747, 19
    %v903 = vpop.permute.xlu0 %902
    %904 = vrot.lane.b32.xlu0 %v748, 19
    %v905 = vpop.permute.xlu0 %904
    %906 = vrot.lane.b32.xlu0 %v749, 19
    %v907 = vpop.permute.xlu0 %906
    %908 = vrot.lane.b32.xlu0 %v750, 19
    %v909 = vpop.permute.xlu0 %908
    %910 = vrot.lane.b32.xlu0 %v751, 19
    %v911 = vpop.permute.xlu0 %910
    %912 = vrot.lane.b32.xlu0 %v771, 19
    %v913 = vpop.permute.xlu0 %912
    %914 = vrot.lane.b32.xlu0 %v772, 19
    %v915 = vpop.permute.xlu0 %914
    %916 = vrot.lane.b32.xlu0 %v773, 19
    %v917 = vpop.permute.xlu0 %916
    %918 = vrot.lane.b32.xlu0 %v774, 19
    %v919 = vpop.permute.xlu0 %918
    %920 = vrot.lane.b32.xlu0 %v775, 19
    %v921 = vpop.permute.xlu0 %920
    %922 = vrot.lane.b32.xlu0 %v770, 19
    %v923 = vpop.permute.xlu0 %922
    %924 = vrot.lane.b32.xlu0 %v788, 19
    %v925 = vpop.permute.xlu0 %924
    %926 = vrot.lane.b32.xlu0 %v789, 19
    %v927 = vpop.permute.xlu0 %926
    %928 = vrot.lane.b32.xlu0 %v790, 19
    %v929 = vpop.permute.xlu0 %928
    %930 = vrot.lane.b32.xlu0 %v791, 19
    %v931 = vpop.permute.xlu0 %930
    %932 = vrot.lane.b32.xlu0 %v792, 19
    %v933 = vpop.permute.xlu0 %932
    %934 = vrot.lane.b32.xlu0 %v787, 19
    %v935 = vpop.permute.xlu0 %934
    %936 = vrot.lane.b32.xlu0 %v808, 19
    %v937 = vpop.permute.xlu0 %936
    %938 = vrot.lane.b32.xlu0 %v809, 19
    %v939 = vpop.permute.xlu0 %938
    %940 = vrot.lane.b32.xlu0 %v810, 19
    %v941 = vpop.permute.xlu0 %940
    %942 = vrot.lane.b32.xlu0 %v811, 19
    %v943 = vpop.permute.xlu0 %942
    %944 = vrot.lane.b32.xlu0 %v812, 19
    %v945 = vpop.permute.xlu0 %944
    %946 = vrot.lane.b32.xlu0 %v813, 19
    %v947 = vpop.permute.xlu0 %946
    %948 = vrot.lane.b32.xlu0 %v815, 19
    %v949 = vpop.permute.xlu0 %948
    %950 = vrot.lane.b32.xlu0 %v826, 19
    %v951 = vpop.permute.xlu0 %950
    %952 = vrot.lane.b32.xlu0 %v827, 19
    %v953 = vpop.permute.xlu0 %952
    %954 = vrot.lane.b32.xlu0 %v828, 19
    %v955 = vpop.permute.xlu0 %954
    %956 = vrot.lane.b32.xlu0 %v829, 19
    %v957 = vpop.permute.xlu0 %956
    %958 = vrot.lane.b32.xlu0 %v830, 19
    %v959 = vpop.permute.xlu0 %958
    %960 = vrot.lane.b32.xlu0 %v832, 19
    %v961 = vpop.permute.xlu0 %960
    %962 = vrot.lane.b32.xlu0 %v843, 19
    %v963 = vpop.permute.xlu0 %962
    %964 = vrot.lane.b32.xlu0 %v844, 19
    %v965 = vpop.permute.xlu0 %964
    %966 = vrot.lane.b32.xlu0 %v845, 19
    %v967 = vpop.permute.xlu0 %966
    %968 = vrot.lane.b32.xlu0 %v846, 19
    %v969 = vpop.permute.xlu0 %968
    %970 = vrot.lane.b32.xlu0 %v847, 19
    %v971 = vpop.permute.xlu0 %970
    %972 = vrot.lane.b32.xlu0 %v849, 19
    %v973 = vpop.permute.xlu0 %972
    %974 = vrot.lane.b32.xlu0 %v860, 19
    %v975 = vpop.permute.xlu0 %974
    %976 = vrot.lane.b32.xlu0 %v861, 19
    %v977 = vpop.permute.xlu0 %976
    %978 = vrot.lane.b32.xlu0 %v862, 19
    %v979 = vpop.permute.xlu0 %978
    %980 = vrot.lane.b32.xlu0 %v863, 19
    %v981 = vpop.permute.xlu0 %980
    %982 = vrot.lane.b32.xlu0 %v864, 19
    %v983 = vpop.permute.xlu0 %982
    %984 = vrot.lane.b32.xlu0 %v866, 19
    %v985 = vpop.permute.xlu0 %984
    %986 = vrot.lane.b32.xlu0 %v877, 19
    %v987 = vpop.permute.xlu0 %986
    %988 = vrot.lane.b32.xlu0 %v878, 19
    %v989 = vpop.permute.xlu0 %988
    %990 = vrot.lane.b32.xlu0 %v879, 19
    %v991 = vpop.permute.xlu0 %990
    %992 = vrot.lane.b32.xlu0 %v880, 19
    %v993 = vpop.permute.xlu0 %992
    %994 = vrot.lane.b32.xlu0 %v881, 19
    %v995 = vpop.permute.xlu0 %994
    %996 = vrot.lane.b32.xlu0 %v883, 19
    %v997 = vpop.permute.xlu0 %996
    %998 = vrot.lane.b32.xlu0 %v894, 19
    %v999 = vpop.permute.xlu0 %998
    %1000 = vrot.lane.b32.xlu0 %v895, 19
    %v1001 = vpop.permute.xlu0 %1000
    %1002 = vrot.lane.b32.xlu0 %v896, 19
    %v1003 = vpop.permute.xlu0 %1002
    %1004 = vrot.lane.b32.xlu0 %v897, 19
    %v1005 = vpop.permute.xlu0 %1004
    %1006 = vrot.lane.b32.xlu0 %v898, 19
    %v1007 = vpop.permute.xlu0 %1006
    %v1008 = vsel %vm314, %v901, %v903
    %v1009 = vsel %vm314, %v903, %v905
    %v1010 = vsel %vm314, %v905, %v907
    %v1011 = vsel %vm314, %v907, %v909
    %v1012 = vsel %vm314, %v909, %v911
    %v1013 = vsel %vm314, %v913, %v915
    %v1014 = vsel %vm314, %v915, %v917
    %v1015 = vsel %vm314, %v917, %v919
    %v1016 = vsel %vm314, %v919, %v921
    %v1017 = vsel %vm314, %v921, %v923
    %v1018 = vsel %vm314, %v925, %v927
    %v1019 = vsel %vm314, %v927, %v929
    %v1020 = vsel %vm314, %v929, %v931
    %v1021 = vsel %vm314, %v931, %v933
    %v1022 = vsel %vm314, %v933, %v935
    %v1023 = vsel %vm314, %v937, %v939
    %v1024 = vsel %vm314, %v939, %v941
    %v1025 = vsel %vm314, %v941, %v943
    %v1026 = vsel %vm314, %v943, %v945
    %v1027 = vsel %vm314, %v945, %v947
    %v1028 = vsel %vm314, %v949, %v951
    %v1029 = vsel %vm314, %v951, %v953
    %v1030 = vsel %vm314, %v953, %v955
    %v1031 = vsel %vm314, %v955, %v957
    %v1032 = vsel %vm314, %v957, %v959
    %v1033 = vsel %vm314, %v961, %v963
    %v1034 = vsel %vm314, %v963, %v965
    %v1035 = vsel %vm314, %v965, %v967
    %v1036 = vsel %vm314, %v967, %v969
    %v1037 = vsel %vm314, %v969, %v971
    %v1038 = vsel %vm314, %v973, %v975
    %v1039 = vsel %vm314, %v975, %v977
    %v1040 = vsel %vm314, %v977, %v979
    %v1041 = vsel %vm314, %v979, %v981
    %v1042 = vsel %vm314, %v981, %v983
    %v1043 = vsel %vm314, %v985, %v987
    %v1044 = vsel %vm314, %v987, %v989
    %v1045 = vsel %vm314, %v989, %v991
    %v1046 = vsel %vm314, %v991, %v993
    %v1047 = vsel %vm314, %v993, %v995
    %v1048 = vsel %vm314, %v997, %v999
    %v1049 = vsel %vm314, %v999, %v1001
    %v1050 = vsel %vm314, %v1001, %v1003
    %v1051 = vsel %vm314, %v1003, %v1005
    %v1052 = vsel %vm314, %v1005, %v1007
    %v1108 = vsel %vm414, %v899, 0
    %1110 = vmatprep.subr.mxu0 %v1009
    %1111 = vmatpush1.msra.mxu0 %v1008
    %1112 = vmatprep.subr.mxu0 %v1014
    %1113 = vmatpush1.msra.mxu0 %v1013
    %1114 = vmatprep.subr.mxu0 %v1019
    %1115 = vmatpush1.msra.mxu0 %v1018
    %1116 = vmatprep.subr.mxu0 %v1024
    %1117 = vmatpush1.msra.mxu0 %v1023
    %1118 = vmatprep.subr.mxu0 %v1029
    %1119 = vmatpush1.msra.mxu0 %v1028
    %1120 = vmatprep.subr.mxu0 %v1034
    %1121 = vmatpush1.msra.mxu0 %v1033
    %1122 = vmatprep.subr.mxu0 %v1039
    %1123 = vmatpush1.msra.mxu0 %v1038
    %1124 = vmatprep.subr.mxu0 %v1044
    %1125 = vmatpush1.msra.mxu0 %v1043
    %1126 = vmatprep.subr.mxu0 %v1049
    %1127 = vmatpush1.msra.mxu0 %v1048
    %1128 = vmatprep.subr.mxu0 0.0
    %1129 = vmatpush1.msra.mxu0 0.0
    %1130 = vmatprep.subr.mxu0 0.0
    %1131 = vmatpush1.msra.mxu0 0.0
    %1132 = vmatprep.subr.mxu0 0.0
    %1133 = vmatpush1.msra.mxu0 0.0
    %1134 = vmatprep.subr.mxu0 0.0
    %1135 = vmatpush1.msra.mxu0 0.0
    %1136 = vmatprep.subr.mxu0 0.0
    %1137 = vmatpush1.msra.mxu0 0.0
    %1138 = vmatprep.subr.mxu0 0.0
    %1139 = vmatpush1.msra.mxu0 0.0
    %1140 = vmatprep.subr.mxu0 0.0
    %1141 = vmatpush1.msra.mxu0 0.0
    %1142 = vmatprep.subr.mxu0 0.0
    %1143 = vmatpush1.msra.mxu0 0.0
    %1144 = vmatprep.subr.mxu0 0.0
    %1145 = vmatpush1.msra.mxu0 0.0
    %1146 = vmatprep.subr.mxu0 0.0
    %1147 = vmatpush1.msra.mxu0 0.0
    %1148 = vmatprep.subr.mxu0 0.0
    %1149 = vmatpush1.msra.mxu0 0.0
    %1150 = vmatprep.subr.mxu0 0.0
    %1151 = vmatpush1.msra.mxu0 0.0
    %1152 = vmatprep.subr.mxu0 0.0
    %1153 = vmatpush1.msra.mxu0 0.0
    %1154 = vmatprep.subr.mxu0 0.0
    %1155 = vmatpush1.msra.mxu0 0.0
    %1156 = vmatprep.subr.mxu0 0.0
    %1157 = vmatpush1.msra.mxu0 0.0
    %1158 = vmatprep.subr.mxu0 0.0
    %1159 = vmatpush1.msra.mxu0 0.0
    %1160 = vmatprep.subr.mxu0 0.0
    %1161 = vmatpush1.msra.mxu0 0.0
    %1162 = vmatprep.subr.mxu0 0.0
    %1163 = vmatpush1.msra.mxu0 0.0
    %1164 = vmatprep.subr.mxu0 0.0
    %1165 = vmatpush1.msra.mxu0 0.0
    %1166 = vmatprep.subr.mxu0 0.0
    %1167 = vmatpush1.msra.mxu0 0.0
    %1168 = vmatprep.subr.mxu0 0.0
    %1169 = vmatpush1.msra.mxu0 0.0
    %1170 = vmatprep.subr.mxu0 0.0
    %1171 = vmatpush1.msra.mxu0 0.0
    %1172 = vmatprep.subr.mxu0 0.0
    %1173 = vmatpush1.msra.mxu0 0.0
    %1174 = vmatprep.mubr.f32.mxu0 0.0
    %1175 = vmatmul.mubr.f32.gmra.mrb[0].mxu0 %v1108
    %v1176 = vpop.f32.mrb[0].mxu0
    %v1177 = vadd.f32 0.0, %v1176
    %v1178 = vpop.f32.mrb[0].mxu0
    %v1179 = vadd.f32 0.0, %v1178
    %1180 = vdwg.mxu0
    %1181 = vmatprep.subr.mxu0 %v1011
    %1182 = vmatpush1.msra.mxu0 %v1010
    %1183 = vmatprep.subr.mxu0 %v1016
    %1184 = vmatpush1.msra.mxu0 %v1015
    %1185 = vmatprep.subr.mxu0 %v1021
    %1186 = vmatpush1.msra.mxu0 %v1020
    %1187 = vmatprep.subr.mxu0 %v1026
    %1188 = vmatpush1.msra.mxu0 %v1025
    %1189 = vmatprep.subr.mxu0 %v1031
    %1190 = vmatpush1.msra.mxu0 %v1030
    %1191 = vmatprep.subr.mxu0 %v1036
    %1192 = vmatpush1.msra.mxu0 %v1035
    %1193 = vmatprep.subr.mxu0 %v1041
    %1194 = vmatpush1.msra.mxu0 %v1040
    %1195 = vmatprep.subr.mxu0 %v1046
    %1196 = vmatpush1.msra.mxu0 %v1045
    %1197 = vmatprep.subr.mxu0 %v1051
    %1198 = vmatpush1.msra.mxu0 %v1050
    %1199 = vmatprep.subr.mxu0 0.0
    %1200 = vmatpush1.msra.mxu0 0.0
    %1201 = vmatprep.subr.mxu0 0.0
    %1202 = vmatpush1.msra.mxu0 0.0
    %1203 = vmatprep.subr.mxu0 0.0
    %1204 = vmatpush1.msra.mxu0 0.0
    %1205 = vmatprep.subr.mxu0 0.0
    %1206 = vmatpush1.msra.mxu0 0.0
    %1207 = vmatprep.subr.mxu0 0.0
    %1208 = vmatpush1.msra.mxu0 0.0
    %1209 = vmatprep.subr.mxu0 0.0
    %1210 = vmatpush1.msra.mxu0 0.0
    %1211 = vmatprep.subr.mxu0 0.0
    %1212 = vmatpush1.msra.mxu0 0.0
    %1213 = vmatprep.subr.mxu0 0.0
    %1214 = vmatpush1.msra.mxu0 0.0
    %1215 = vmatprep.subr.mxu0 0.0
    %1216 = vmatpush1.msra.mxu0 0.0
    %1217 = vmatprep.subr.mxu0 0.0
    %1218 = vmatpush1.msra.mxu0 0.0
    %1219 = vmatprep.subr.mxu0 0.0
    %1220 = vmatpush1.msra.mxu0 0.0
    %1221 = vmatprep.subr.mxu0 0.0
    %1222 = vmatpush1.msra.mxu0 0.0
    %1223 = vmatprep.subr.mxu0 0.0
    %1224 = vmatpush1.msra.mxu0 0.0
    %1225 = vmatprep.subr.mxu0 0.0
    %1226 = vmatpush1.msra.mxu0 0.0
    %1227 = vmatprep.subr.mxu0 0.0
    %1228 = vmatpush1.msra.mxu0 0.0
    %1229 = vmatprep.subr.mxu0 0.0
    %1230 = vmatpush1.msra.mxu0 0.0
    %1231 = vmatprep.subr.mxu0 0.0
    %1232 = vmatpush1.msra.mxu0 0.0
    %1233 = vmatprep.subr.mxu0 0.0
    %1234 = vmatpush1.msra.mxu0 0.0
    %1235 = vmatprep.subr.mxu0 0.0
    %1236 = vmatpush1.msra.mxu0 0.0
    %1237 = vmatprep.subr.mxu0 0.0
    %1238 = vmatpush1.msra.mxu0 0.0
    %1239 = vmatprep.subr.mxu0 0.0
    %1240 = vmatpush1.msra.mxu0 0.0
    %1241 = vmatprep.subr.mxu0 0.0
    %1242 = vmatpush1.msra.mxu0 0.0
    %1243 = vmatprep.subr.mxu0 0.0
    %1244 = vmatpush1.msra.mxu0 0.0
    %1245 = vmatprep.mubr.f32.mxu0 0.0
    %1246 = vmatmul.mubr.f32.gmra.mrb[0].mxu0 %v1108
    %v1247 = vpop.f32.mrb[0].mxu0
    %v1248 = vadd.f32 0.0, %v1247
    %v1249 = vpop.f32.mrb[0].mxu0
    %v1250 = vadd.f32 0.0, %v1249
    %1251 = vdwg.mxu0
    %1252 = vmatprep.subr.mxu0 %v911
    %1253 = vmatpush1.msra.mxu0 %v1012
    %1254 = vmatprep.subr.mxu0 %v923
    %1255 = vmatpush1.msra.mxu0 %v1017
    %1256 = vmatprep.subr.mxu0 %v935
    %1257 = vmatpush1.msra.mxu0 %v1022
    %1258 = vmatprep.subr.mxu0 %v947
    %1259 = vmatpush1.msra.mxu0 %v1027
    %1260 = vmatprep.subr.mxu0 %v959
    %1261 = vmatpush1.msra.mxu0 %v1032
    %1262 = vmatprep.subr.mxu0 %v971
    %1263 = vmatpush1.msra.mxu0 %v1037
    %1264 = vmatprep.subr.mxu0 %v983
    %1265 = vmatpush1.msra.mxu0 %v1042
    %1266 = vmatprep.subr.mxu0 %v995
    %1267 = vmatpush1.msra.mxu0 %v1047
    %1268 = vmatprep.subr.mxu0 %v1007
    %1269 = vmatpush1.msra.mxu0 %v1052
    %1270 = vmatprep.subr.mxu0 0.0
    %1271 = vmatpush1.msra.mxu0 0.0
    %1272 = vmatprep.subr.mxu0 0.0
    %1273 = vmatpush1.msra.mxu0 0.0
    %1274 = vmatprep.subr.mxu0 0.0
    %1275 = vmatpush1.msra.mxu0 0.0
    %1276 = vmatprep.subr.mxu0 0.0
    %1277 = vmatpush1.msra.mxu0 0.0
    %1278 = vmatprep.subr.mxu0 0.0
    %1279 = vmatpush1.msra.mxu0 0.0
    %1280 = vmatprep.subr.mxu0 0.0
    %1281 = vmatpush1.msra.mxu0 0.0
    %1282 = vmatprep.subr.mxu0 0.0
    %1283 = vmatpush1.msra.mxu0 0.0
    %1284 = vmatprep.subr.mxu0 0.0
    %1285 = vmatpush1.msra.mxu0 0.0
    %1286 = vmatprep.subr.mxu0 0.0
    %1287 = vmatpush1.msra.mxu0 0.0
    %1288 = vmatprep.subr.mxu0 0.0
    %1289 = vmatpush1.msra.mxu0 0.0
    %1290 = vmatprep.subr.mxu0 0.0
    %1291 = vmatpush1.msra.mxu0 0.0
    %1292 = vmatprep.subr.mxu0 0.0
    %1293 = vmatpush1.msra.mxu0 0.0
    %1294 = vmatprep.subr.mxu0 0.0
    %1295 = vmatpush1.msra.mxu0 0.0
    %1296 = vmatprep.subr.mxu0 0.0
    %1297 = vmatpush1.msra.mxu0 0.0
    %1298 = vmatprep.subr.mxu0 0.0
    %1299 = vmatpush1.msra.mxu0 0.0
    %1300 = vmatprep.subr.mxu0 0.0
    %1301 = vmatpush1.msra.mxu0 0.0
    %1302 = vmatprep.subr.mxu0 0.0
    %1303 = vmatpush1.msra.mxu0 0.0
    %1304 = vmatprep.subr.mxu0 0.0
    %1305 = vmatpush1.msra.mxu0 0.0
    %1306 = vmatprep.subr.mxu0 0.0
    %1307 = vmatpush1.msra.mxu0 0.0
    %1308 = vmatprep.subr.mxu0 0.0
    %1309 = vmatpush1.msra.mxu0 0.0
    %1310 = vmatprep.subr.mxu0 0.0
    %1311 = vmatpush1.msra.mxu0 0.0
    %1312 = vmatprep.subr.mxu0 0.0
    %1313 = vmatpush1.msra.mxu0 0.0
    %1314 = vmatprep.subr.mxu0 0.0
    %1315 = vmatpush1.msra.mxu0 0.0
    %1316 = vmatprep.mubr.f32.mxu0 0.0
    %1317 = vmatmul.mubr.f32.gmra.mrb[0].mxu0 %v1108
    %v1318 = vpop.f32.mrb[0].mxu0
    %v1319 = vadd.f32 0.0, %v1318
    %v1320 = vpop.f32.mrb[0].mxu0
    %v1321 = vadd.f32 0.0, %v1320
    %1322 = vdwg.mxu0
    %v1323 = vld [vmem:[%s6] sm:$0xff]
    %v1324 = vld [vmem:[%s7] sm:$0xff]
    %v1325 = vsel %vm658, %v1177, 0.0
    %v1326 = vsel %vm659, %v1179, 0.0
    %v1327 = vsel %vm660, %v1248, 0.0
    %v1328 = vsel %vm661, %v1250, 0.0
    %v1329 = vsel %vm662, %v1319, 0.0
    %v1330 = vsel %vm663, %v1321, 0.0
    %v1331 = vadd.f32 %v1325, %v1326
    %v1332 = vadd.f32 %v1331, %v1327
    %v1333 = vadd.f32 %v1332, %v1328
    %v1334 = vadd.f32 %v1333, %v1329
    %v1335 = vsel %vm674, %v1330, 0.0
    %v1336 = vadd.f32 %v1334, %v1335
    %1337 = vadd.xlane.f32.xlu0 %v1336
    %v1338 = vpop.xlane.xlu0 %1337
    %v1339 = vmul.f32 %v1338, 0.001953125
    %v1340 = vmul.f32 %v1325, %v1325
    %v1341 = vmul.f32 %v1326, %v1326
    %v1342 = vmul.f32 %v1327, %v1327
    %v1343 = vmul.f32 %v1328, %v1328
    %v1344 = vmul.f32 %v1329, %v1329
    %v1345 = vmul.f32 %v1330, %v1330
    %v1346 = vadd.f32 %v1340, %v1341
    %v1347 = vadd.f32 %v1346, %v1342
    %v1348 = vadd.f32 %v1347, %v1343
    %v1349 = vadd.f32 %v1348, %v1344
    %v1350 = vsel %vm674, %v1345, 0.0
    %v1351 = vadd.f32 %v1349, %v1350
    %1352 = vadd.xlane.f32.xlu0 %v1351
    %v1353 = vpop.xlane.xlu0 %1352
    %v1354 = vmul.f32 %v1353, 0.001953125
    %v1355 = vmul.f32 %v1339, %v1339
    %v1356 = vsub.f32 %v1354, %v1355
    %v1357 = vadd.f32 %v1356, 1e-05
    %v1358 = vrsqrt.pop %v1357
    %v1359 = vmul.f32 %v1323, %v1358
    %v1360 = vmul.f32 %v1339, %v1359
    %v1361 = vsub.f32 %v1324, %v1360
    %1363 = vset.pattern.permute.xlu0 0
    %1364 = vperm.xlu0 %1363, %v1359
    %v1365 = vpop.permute.xlu0 %1364
    %v1367 = vmul.f32 %v1177, %v1365
    %v1368 = vmul.f32 %v1179, %v1365
    %v1369 = vmul.f32 %v1248, %v1365
    %v1370 = vmul.f32 %v1250, %v1365
    %v1371 = vmul.f32 %v1319, %v1365
    %v1372 = vmul.f32 %v1321, %v1365
    %1374 = vset.pattern.permute.xlu0 0
    %1375 = vperm.xlu0 %1374, %v1361
    %v1376 = vpop.permute.xlu0 %1375
    %v1378 = vadd.f32 %v1367, %v1376
    %v1379 = vadd.f32 %v1368, %v1376
    %v1380 = vadd.f32 %v1369, %v1376
    %v1381 = vadd.f32 %v1370, %v1376
    %v1382 = vadd.f32 %v1371, %v1376
    %v1383 = vadd.f32 %v1372, %v1376
    %v1384 = vadd.f32 %v1378, %v45
    %v1385 = vadd.f32 %v1379, %v46
    %v1386 = vadd.f32 %v1380, %v47
    %v1387 = vadd.f32 %v1381, %v48
    %v1388 = vadd.f32 %v1382, %v49
    %v1389 = vadd.f32 %v1383, %v50
    %v1390 = vmax.f32 %v1384, 0.0
    %v1391 = vmax.f32 %v1385, 0.0
    %v1392 = vmax.f32 %v1386, 0.0
    %v1393 = vmax.f32 %v1387, 0.0
    %v1394 = vmax.f32 %v1388, 0.0
    %v1395 = vmax.f32 %v1389, 0.0
    %1396 = vst [vmem:[#allocation6] sm:$0xff] %v1390
    %1397 = vst [vmem:[#allocation6 + $0x8] sm:$0xff] %v1391
    %1398 = vst [vmem:[#allocation6 + $0x10] sm:$0xff] %v1392
    %1399 = vst [vmem:[#allocation6 + $0x18] sm:$0xff] %v1393
    %1400 = vst [vmem:[#allocation6 + $0x20] sm:$0xff] %v1394
    %1401 = vst.msk [vmem:[#allocation6 + $0x28] sm:$0xff] %vm674, %v1395
    // Predicated region
    $region38: #{tpu_custom_call.1} parent=1 // pred_check
      _
    $region39: #{tpu_custom_call.1} parent=1 // pred_check_branch
      %1403 = sbr.rel (0) target = $region41
    $region40: #{tpu_custom_call.1} parent=1 // pred_region
      %s1405 = ssub.s32 768, 768
      %1406 = vsyncadd [#allocation5], %s1405
      %s1408 = sshll.u32 [#allocation6], 4
      %s1409 = int_to_ptr.vmem [resolvable:$true] %s1408
      %1411 = dma.vmem_to_hbm [thread:$0]  %s1409, 768, %s8, [#allocation5]
    $region41: #{tpu_custom_call.1} parent=1 // pred_fallthru
      _
    // Predicated region
    $region42: #{tpu_custom_call.1} parent=1 // pred_check
      _
    $region43: #{tpu_custom_call.1} parent=1 // pred_check_branch
      %1413 = sbr.rel (0) target = $region45
    $region44: #{tpu_custom_call.1} parent=1 // pred_region
      %1414 = dma.done [#allocation5], 768
    $region45: #{tpu_custom_call.1} parent=1 // pred_fallthru
      _
    %1415 = vsyncpa [#allocation4], 1
    %1416 = vsyncpa [#allocation5], 1

</llo_original>
